<compile_context>
chip_gen: v7x
topology: tpu7x:2x2x1
jax: 0.10.0
libtpu: 0.0.40
codegen_flags: <defaults>
</compile_context>

<pallas_src>
import functools
import math

import jax
import jax.numpy as jnp
from jax.experimental import pallas as pl
from jax.experimental.pallas import tpu as pltpu

LN_EPS = 1e-5  # nn.LayerNorm default


def _layer_norm(x, w, b):
    mean = jnp.mean(x, axis=-1, keepdims=True)
    var = jnp.mean(jnp.square(x - mean), axis=-1, keepdims=True)
    return (x - mean) * jax.lax.rsqrt(var + LN_EPS) * w + b


# ---------------------------------------------------------------------------
# Fused Pallas kernel: all encoder layers + max-pool, one grid = (B//Bt, L)
# ---------------------------------------------------------------------------
def fused_encoder_maxpool_kernel(
        x_ref,                      # (Bt, S, D)   input activations block
        wqkv_ref, bqkv_ref,         # (D, 3D) [matmul dtype], (1, 3D) f32
        wo_ref, bo_ref,             # (D, D),  (1, D)
        ln1w_ref, ln1b_ref,         # (1, D)
        w1_ref, b1_ref,             # (D, F),  (1, F)
        w2_ref, b2_ref,             # (F, D),  (1, D)
        ln2w_ref, ln2b_ref,         # (1, D)
        o_ref,                      # (Bt, 1, D)   pooled output block
        x_vmem,                     # VMEM scratch (Bt, S, D) f32, carried over layers
        *, nhead, num_layers, matmul_dtype):
    layer = pl.program_id(1)

    @pl.when(layer == 0)
    def _():
        x_vmem[...] = x_ref[...]

    xb = x_vmem[...]                                 # (Bt, S, D) f32
    Bt, S, D = xb.shape
    T = Bt * S
    hd = D // nhead
    # Leading-dim merge only (free when S % 8 == 0 or Bt == 1).
    x = xb.reshape(T, D)

    def c(a):                                        # matmul-input cast only
        return a.astype(matmul_dtype)

    # ---- fused QKV projection: ONE (T, D) @ (D, 3D) MXU matmul --------------
    # Weights already stored in matmul_dtype (no in-kernel weight cast);
    # softmax scale pre-folded into the Q columns and bias.
    qkv = (jnp.dot(c(x), wqkv_ref[...], preferred_element_type=jnp.float32)
           + bqkv_ref[...])                          # (T, 3D) f32
    # q/k/v split at D-multiples (lane-aligned whenever D % 128 == 0).
    q = qkv[:, 0:D]
    k = qkv[:, D:2 * D]
    v = qkv[:, 2 * D:3 * D]

    # ---- per-head scaled dot-product attention -------------------------------
    # Head extraction = static lane slice + free leading-dim reshape.  The
    # per-head (S, hd) matmuls are inherent to attention and cost the same on
    # the MXU as a head-batched einsum (the MXU does not fuse across batch dims).
    # TODO(synk): flash-style KV tiling for long S (scores are S x S per head).
    ctx_heads = []
    for h in range(nhead):
        lo, hi = h * hd, (h + 1) * hd
        qh = c(q[:, lo:hi]).reshape(Bt, S, hd)
        kh = c(k[:, lo:hi]).reshape(Bt, S, hd)
        vh = c(v[:, lo:hi]).reshape(Bt, S, hd)
        s = jnp.einsum("bqe,bke->bqk", qh, kh,
                       preferred_element_type=jnp.float32)        # (Bt, S, S)
        s = s - jnp.max(s, axis=-1, keepdims=True)
        p = jnp.exp(s)
        p = p * pl.reciprocal(jnp.sum(p, axis=-1, keepdims=True), approx=True)
        ctxh = jnp.einsum("bqk,bke->bqe", c(p), vh,
                          preferred_element_type=jnp.float32)     # (Bt, S, hd)
        ctx_heads.append(ctxh.reshape(T, hd))
    ctx = jnp.concatenate(ctx_heads, axis=-1)                     # (T, D) head-major

    # ---- output projection: ONE (T, D) @ (D, D) MXU matmul -------------------
    attn = (jnp.dot(c(ctx), wo_ref[...], preferred_element_type=jnp.float32)
            + bo_ref[...])                                        # (T, D)

    # residual + post-norm (dropout == identity at inference)
    x = _layer_norm(x + attn, ln1w_ref[...], ln1b_ref[...])

    # ---- feed-forward (ReLU), pre-transposed weights --------------------------
    # TODO(synk): tile along dim_feedforward on v7x at production sizes.
    h1 = (jnp.dot(c(x), w1_ref[...], preferred_element_type=jnp.float32)
          + b1_ref[...])
    h1 = jnp.maximum(h1, 0.0)
    h2 = (jnp.dot(c(h1), w2_ref[...], preferred_element_type=jnp.float32)
          + b2_ref[...])
    x = _layer_norm(x + h2, ln2w_ref[...], ln2b_ref[...])

    x_vmem[...] = x.reshape(Bt, S, D)

    @pl.when(layer == num_layers - 1)
    def _():
        # AdaptiveMaxPool1d(1) == max over the sequence axis, fused epilogue.
        o_ref[...] = jnp.max(x.reshape(Bt, S, D), axis=1, keepdims=True)


# ---------------------------------------------------------------------------
# Host-side weight packing: stack layers, fuse QKV 2-D, pre-transpose, fold scale,
# cast matmul weights to matmul_dtype (bf16 halves DMA + VMEM on all generations).
# ---------------------------------------------------------------------------
def pack_layer_params(layer_params, nhead, matmul_dtype):
    D = layer_params[0]["wq"].shape[0]
    hd = D // nhead
    scale = 1.0 / math.sqrt(hd)

    def qkv_w(p):
        # Columns: [Q | K | V], each D wide, head-major within each block;
        # attention scale folded into the Q columns.
        return jnp.concatenate([(p["wq"] * scale).T, p["wk"].T, p["wv"].T], axis=1)

    def qkv_b(p):
        return jnp.concatenate([p["bq"] * scale, p["bk"], p["bv"]], axis=-1)  # (1,3D)

    def stack(fn, dtype=jnp.float32):
        return jnp.stack([fn(p) for p in layer_params], axis=0).astype(dtype)

    md = matmul_dtype
    return dict(
        wqkv=stack(qkv_w, md),                  # (L, D, 3D)
        bqkv=stack(qkv_b),                      # (L, 1, 3D)
        wo=stack(lambda p: p["wo"].T, md),      # (L, D, D)
        bo=stack(lambda p: p["bo"]),            # (L, 1, D)
        ln1w=stack(lambda p: p["ln1w"]),
        ln1b=stack(lambda p: p["ln1b"]),
        w1=stack(lambda p: p["w1"].T, md),      # (L, D, F)
        b1=stack(lambda p: p["b1"]),            # (L, 1, F)
        w2=stack(lambda p: p["w2"].T, md),      # (L, F, D)
        b2=stack(lambda p: p["b2"]),            # (L, 1, D)
        ln2w=stack(lambda p: p["ln2w"]),
        ln2b=stack(lambda p: p["ln2b"]),
    )


_WEIGHT_ORDER = ("wqkv", "bqkv", "wo", "bo", "ln1w", "ln1b",
                 "w1", "b1", "w2", "b2", "ln2w", "ln2b")


def _pick_batch_tile(B, S, D, act_budget_bytes=8 << 20):
    """Largest divisor of B whose activation block stays well inside VMEM."""
    if S % 8 != 0:
        return 1  # keep leading-dim reshapes trivially free
    best = 1
    for bt in range(1, B + 1):
        if B % bt:
            continue
        if bt * S * D * 4 * 3 + bt * S * S * 4 <= act_budget_bytes:
            best = bt
    return best


def _vmem_limit_bytes(Bt, S, D, F, matmul_dtype):
    """Scoped-VMEM limit derived from actual block shapes, capped by the chip."""
    wb = jnp.dtype(matmul_dtype).itemsize
    T = Bt * S
    weights = (D * 3 * D + D * D + D * F + F * D) * wb \
              + (3 * D + 4 * D + F + 3 * D) * 4                  # biases + LN (f32)
    act_blocks = 3 * Bt * S * D * 4                              # in block (x2) + scratch
    inter = (T * 3 * D + T * F + 2 * T * D + Bt * S * S) * 4     # live temporaries
    need = int(1.25 * (2 * weights + act_blocks + inter)) + (4 << 20)
    try:
        cap = int(pltpu.get_tpu_info().vmem_capacity_bytes)
    except Exception:
        cap = 64 << 20                                           # v7x per-core floor
    return max(16 << 20, min(need, int(cap * 0.85)))


# ---------------------------------------------------------------------------
# Wrapper: one pallas_call for the whole network
# ---------------------------------------------------------------------------
def transformer_with_maxpool(src_sbd, layer_params, nhead,
                             matmul_dtype=jnp.float32, batch_tile=None):
    # src: (S, B, D) — PyTorch seq-first layout.  Returns (B, D).
    x = jnp.transpose(src_sbd, (1, 0, 2)).astype(jnp.float32)    # (B, S, D)
    B, S, D = x.shape
    L = len(layer_params)
    F = layer_params[0]["w1"].shape[0]
    assert D % nhead == 0

    packed = pack_layer_params(layer_params, nhead, matmul_dtype)
    weight_args = [packed[k] for k in _WEIGHT_ORDER]

    Bt = batch_tile if batch_tile is not None else _pick_batch_tile(B, S, D)
    assert B % Bt == 0

    def wspec(arr):
        nd = arr.ndim
        # New layer block each step along the (sequential) layer grid axis ->
        # layer l+1's weights are prefetched while layer l computes.
        return pl.BlockSpec((None,) + arr.shape[1:],
                            lambda b, l, _nd=nd: (l,) + (0,) * (_nd - 1))

    kernel = functools.partial(fused_encoder_maxpool_kernel,
                               nhead=nhead, num_layers=L,
                               matmul_dtype=matmul_dtype)

    out = pl.pallas_call(
        kernel,
        out_shape=jax.ShapeDtypeStruct((B, 1, D), jnp.float32),
        grid=(B // Bt, L),
        in_specs=[pl.BlockSpec((Bt, S, D), lambda b, l: (b, 0, 0))]
                 + [wspec(a) for a in weight_args],
        out_specs=pl.BlockSpec((Bt, 1, D), lambda b, l: (b, 0, 0)),
        scratch_shapes=[pltpu.VMEM((Bt, S, D), jnp.float32)],
        compiler_params=pltpu.CompilerParams(
            dimension_semantics=("parallel", "arbitrary"),
            vmem_limit_bytes=_vmem_limit_bytes(Bt, S, D, F, matmul_dtype)),
    )(x, *weight_args)
    return out[:, 0, :]                                           # (B, D)


# ---------------------------------------------------------------------------
# Deterministic parameter init (shapes match nn.TransformerEncoderLayer)
# ---------------------------------------------------------------------------
def init_params(key, d_model, nhead, num_layers, dim_ff):
    def u(k, shape, fan_in):
        bound = 1.0 / math.sqrt(fan_in)
        return jax.random.uniform(k, shape, jnp.float32, -bound, bound)

    layers = []
    for l in range(num_layers):
        ks = jax.random.split(jax.random.fold_in(key, l), 12)
        layers.append(dict(
            wq=u(ks[0], (d_model, d_model), d_model),
            bq=u(ks[1], (1, d_model), d_model),
            wk=u(ks[2], (d_model, d_model), d_model),
            bk=u(ks[3], (1, d_model), d_model),
            wv=u(ks[4], (d_model, d_model), d_model),
            bv=u(ks[5], (1, d_model), d_model),
            wo=u(ks[6], (d_model, d_model), d_model),
            bo=u(ks[7], (1, d_model), d_model),
            ln1w=jnp.ones((1, d_model), jnp.float32),
            ln1b=jnp.zeros((1, d_model), jnp.float32),
            w1=u(ks[8], (dim_ff, d_model), d_model),
            b1=u(ks[9], (1, dim_ff), d_model),
            w2=u(ks[10], (d_model, dim_ff), dim_ff),
            b2=u(ks[11], (1, d_model), dim_ff),
            ln2w=jnp.ones((1, d_model), jnp.float32),
            ln2b=jnp.zeros((1, d_model), jnp.float32),
        ))
    return layers


# ---------------------------------------------------------------------------
# Pure-JAX reference (same math, batched) for correctness check
# ---------------------------------------------------------------------------
def reference_forward(src_sbd, layer_params, nhead):
    x = jnp.transpose(src_sbd, (1, 0, 2)).astype(jnp.float32)    # (B, S, D)
    B, S, D = x.shape
    hd = D // nhead
    scale = 1.0 / math.sqrt(hd)
    for p in layer_params:
        q = x @ p["wq"].T + p["bq"]
        k = x @ p["wk"].T + p["bk"]
        v = x @ p["wv"].T + p["bv"]
        qh = q.reshape(B, S, nhead, hd)
        kh = k.reshape(B, S, nhead, hd)
        vh = v.reshape(B, S, nhead, hd)
        scores = jnp.einsum("bshd,bthd->bhst", qh * scale, kh)
        attn = jax.nn.softmax(scores, axis=-1)
        o = jnp.einsum("bhst,bthd->bshd", attn, vh).reshape(B, S, D)
        o = o @ p["wo"].T + p["bo"]
        x = _layer_norm(x + o, p["ln1w"], p["ln1b"])
        h1 = jnp.maximum(x @ p["w1"].T + p["b1"], 0.0)
        h2 = h1 @ p["w2"].T + p["b2"]
        x = _layer_norm(x + h2, p["ln2w"], p["ln2b"])
    return jnp.max(x, axis=1)                                    # (B, D)


if __name__ == "__main__":
    # Small shapes consistent with the module's forward: src is (S, B, d_model).
    S, B = 8, 2
    d_model, nhead, num_layers, dim_feedforward = 32, 4, 2, 64

    key = jax.random.PRNGKey(0)
    k_src, k_par = jax.random.split(key)
    src = jax.random.normal(k_src, (S, B, d_model), jnp.float32)
    params = init_params(k_par, d_model, nhead, num_layers, dim_feedforward)

    ref = reference_forward(src, params, nhead)

    # f32 matmul path: tight parity with the PyTorch-style f32 reference.
    fwd_f32 = jax.jit(functools.partial(transformer_with_maxpool, nhead=nhead,
                                        matmul_dtype=jnp.float32))
    out = jax.block_until_ready(fwd_f32(src, params))
    assert out.shape == (B, d_model), out.shape
    max_err = float(jnp.max(jnp.abs(out - ref)))
    # 5e-3 cushion accommodates the approximate-reciprocal softmax normalization.
    assert max_err < 5e-3, f"f32 max_err={max_err}"

    # bf16-weight / bf16-MXU path (the production configuration): weights are
    # stored in HBM as bf16, all accumulation stays f32.
    fwd_bf16 = jax.jit(functools.partial(transformer_with_maxpool, nhead=nhead,
                                         matmul_dtype=jnp.bfloat16))
    out_bf16 = jax.block_until_ready(fwd_bf16(src, params))
    max_err_bf16 = float(jnp.max(jnp.abs(out_bf16 - ref)))
    assert max_err_bf16 < 0.3, f"bf16 max_err={max_err_bf16}"

    print("KERNEL_OK")
</pallas_src>

<mosaic_0001>
module attributes {stable_mosaic.version = 11 : i64} {
  func.func @fused_encoder_maxpool_kernel(%arg0: i32, %arg1: i32, %arg2: memref<2x8x32xf32, #tpu.memory_space<vmem>>, %arg3: memref<1x32x96xf32, #tpu.memory_space<vmem>>, %arg4: memref<1x1x96xf32, #tpu.memory_space<vmem>>, %arg5: memref<1x32x32xf32, #tpu.memory_space<vmem>>, %arg6: memref<1x1x32xf32, #tpu.memory_space<vmem>>, %arg7: memref<1x1x32xf32, #tpu.memory_space<vmem>>, %arg8: memref<1x1x32xf32, #tpu.memory_space<vmem>>, %arg9: memref<1x32x64xf32, #tpu.memory_space<vmem>>, %arg10: memref<1x1x64xf32, #tpu.memory_space<vmem>>, %arg11: memref<1x64x32xf32, #tpu.memory_space<vmem>>, %arg12: memref<1x1x32xf32, #tpu.memory_space<vmem>>, %arg13: memref<1x1x32xf32, #tpu.memory_space<vmem>>, %arg14: memref<1x1x32xf32, #tpu.memory_space<vmem>>, %arg15: memref<2x1x32xf32, #tpu.memory_space<vmem>>, %arg16: memref<2x8x32xf32, #tpu.memory_space<vmem>>) attributes {dimension_semantics = [#tpu.dimension_semantics<parallel>, #tpu.dimension_semantics<arbitrary>], iteration_bounds = array<i64: 1, 2>, scalar_prefetch = 0 : i64, scratch_operands = 1 : i64, tpu.core_type = #tpu.core_type<tc>, window_params = [{transform_indices = @transform_0, window_bounds = array<i64: 2, 8, 32>}, {transform_indices = @transform_1, window_bounds = array<i64: 1, 32, 96>}, {transform_indices = @transform_2, window_bounds = array<i64: 1, 1, 96>}, {transform_indices = @transform_3, window_bounds = array<i64: 1, 32, 32>}, {transform_indices = @transform_4, window_bounds = array<i64: 1, 1, 32>}, {transform_indices = @transform_5, window_bounds = array<i64: 1, 1, 32>}, {transform_indices = @transform_6, window_bounds = array<i64: 1, 1, 32>}, {transform_indices = @transform_7, window_bounds = array<i64: 1, 32, 64>}, {transform_indices = @transform_8, window_bounds = array<i64: 1, 1, 64>}, {transform_indices = @transform_9, window_bounds = array<i64: 1, 64, 32>}, {transform_indices = @transform_10, window_bounds = array<i64: 1, 1, 32>}, {transform_indices = @transform_11, window_bounds = array<i64: 1, 1, 32>}, {transform_indices = @transform_12, window_bounds = array<i64: 1, 1, 32>}, {transform_indices = @transform_13, window_bounds = array<i64: 2, 1, 32>}]} {
    %c0_i32 = arith.constant 0 : i32
    %0 = arith.cmpi eq, %arg1, %c0_i32 : i32
    %1 = arith.extui %0 : i1 to i32
    %c0_i32_0 = arith.constant 0 : i32
    %2 = arith.cmpi ne, %1, %c0_i32_0 : i32
    scf.if %2 {
      %c0_73 = arith.constant 0 : index
      %c0_74 = arith.constant 0 : index
      %c0_75 = arith.constant 0 : index
      %174 = vector.load %arg2[%c0_73, %c0_74, %c0_75] : memref<2x8x32xf32, #tpu.memory_space<vmem>>, vector<2x8x32xf32>
      %c0_76 = arith.constant 0 : index
      %c0_77 = arith.constant 0 : index
      %c0_78 = arith.constant 0 : index
      %175 = vector.load %arg16[%c0_76, %c0_77, %c0_78] : memref<2x8x32xf32, #tpu.memory_space<vmem>>, vector<2x8x32xf32>
      tpu.vector_store %arg16[%c0_76, %c0_77, %c0_78], %174 {strides = array<i32>} : memref<2x8x32xf32, #tpu.memory_space<vmem>>, vector<2x8x32xf32>,
    } else {
    }
    %c0 = arith.constant 0 : index
    %c0_1 = arith.constant 0 : index
    %c0_2 = arith.constant 0 : index
    %3 = vector.load %arg16[%c0, %c0_1, %c0_2] : memref<2x8x32xf32, #tpu.memory_space<vmem>>, vector<2x8x32xf32>
    %4 = vector.shape_cast %3 : vector<2x8x32xf32> to vector<16x32xf32>
    %c0_3 = arith.constant 0 : index
    %c0_4 = arith.constant 0 : index
    %c0_5 = arith.constant 0 : index
    %5 = vector.load %arg3[%c0_3, %c0_4, %c0_5] : memref<1x32x96xf32, #tpu.memory_space<vmem>>, vector<1x32x96xf32>
    %6 = vector.shape_cast %5 : vector<1x32x96xf32> to vector<32x96xf32>
    %cst = arith.constant dense<0.000000e+00> : vector<16x96xf32>
    %7 = tpu.matmul %4, %6, %cst {dimension_numbers = #tpu.dot_dimension_numbers<[1], [0], [0], [1], [0, 0, 1, 1], [], []>} : vector<16x32xf32>, vector<32x96xf32>, vector<16x96xf32> -> vector<16x96xf32>
    %c0_6 = arith.constant 0 : index
    %c0_7 = arith.constant 0 : index
    %c0_8 = arith.constant 0 : index
    %8 = vector.load %arg4[%c0_6, %c0_7, %c0_8] : memref<1x1x96xf32, #tpu.memory_space<vmem>>, vector<1x1x96xf32>
    %9 = vector.shape_cast %8 : vector<1x1x96xf32> to vector<1x96xf32>
    %10 = vector.broadcast %9 : vector<1x96xf32> to vector<16x96xf32>
    %11 = arith.addf %7, %10 : vector<16x96xf32>
    %12 = vector.extract_strided_slice %11 {offsets = [0, 0], sizes = [16, 32], strides = [1, 1]} : vector<16x96xf32> to vector<16x32xf32>
    %13 = vector.extract_strided_slice %11 {offsets = [0, 32], sizes = [16, 32], strides = [1, 1]} : vector<16x96xf32> to vector<16x32xf32>
    %14 = vector.extract_strided_slice %11 {offsets = [0, 64], sizes = [16, 32], strides = [1, 1]} : vector<16x96xf32> to vector<16x32xf32>
    %15 = vector.extract_strided_slice %12 {offsets = [0, 0], sizes = [16, 8], strides = [1, 1]} : vector<16x32xf32> to vector<16x8xf32>
    %16 = vector.shape_cast %15 : vector<16x8xf32> to vector<2x8x8xf32>
    %17 = vector.extract_strided_slice %13 {offsets = [0, 0], sizes = [16, 8], strides = [1, 1]} : vector<16x32xf32> to vector<16x8xf32>
    %18 = vector.shape_cast %17 : vector<16x8xf32> to vector<2x8x8xf32>
    %19 = vector.extract_strided_slice %14 {offsets = [0, 0], sizes = [16, 8], strides = [1, 1]} : vector<16x32xf32> to vector<16x8xf32>
    %20 = vector.shape_cast %19 : vector<16x8xf32> to vector<2x8x8xf32>
    "tpu.trace_start"() <{level = 10 : i32, message = "bqe,bke->bqk"}> : () -> ()
    %cst_9 = arith.constant dense<0.000000e+00> : vector<2x8x8xf32>
    %21 = tpu.matmul %16, %18, %cst_9 {dimension_numbers = #tpu.dot_dimension_numbers<[2], [2], [1], [1], [0, 0, 0, 1, 1, 1], [0], [0]>} : vector<2x8x8xf32>, vector<2x8x8xf32>, vector<2x8x8xf32> -> vector<2x8x8xf32>
    "tpu.trace_stop"() : () -> ()
    %cst_10 = arith.constant dense<0xFF800000> : vector<2x8xf32>
    %22 = vector.multi_reduction <maximumf>, %21, %cst_10 [2] : vector<2x8x8xf32> to vector<2x8xf32>
    %23 = vector.shape_cast %22 : vector<2x8xf32> to vector<2x8x1xf32>
    %24 = vector.broadcast %23 : vector<2x8x1xf32> to vector<2x8x8xf32>
    %25 = arith.subf %21, %24 : vector<2x8x8xf32>
    %26 = math.exp %25 : vector<2x8x8xf32>
    %cst_11 = arith.constant dense<0.000000e+00> : vector<2x8xf32>
    %27 = vector.multi_reduction <add>, %26, %cst_11 [2] : vector<2x8x8xf32> to vector<2x8xf32>
    %28 = vector.shape_cast %27 : vector<2x8xf32> to vector<2x8x1xf32>
    %29 = tpu.reciprocal %28 {approx = true} : vector<2x8x1xf32> -> vector<2x8x1xf32>
    %30 = vector.broadcast %29 : vector<2x8x1xf32> to vector<2x8x8xf32>
    %31 = arith.mulf %26, %30 : vector<2x8x8xf32>
    "tpu.trace_start"() <{level = 10 : i32, message = "bqk,bke->bqe"}> : () -> ()
    %cst_12 = arith.constant dense<0.000000e+00> : vector<2x8x8xf32>
    %32 = tpu.matmul %31, %20, %cst_12 {dimension_numbers = #tpu.dot_dimension_numbers<[2], [1], [1], [2], [0, 0, 0, 1, 1, 2], [0], [0]>} : vector<2x8x8xf32>, vector<2x8x8xf32>, vector<2x8x8xf32> -> vector<2x8x8xf32>
    "tpu.trace_stop"() : () -> ()
    %33 = vector.shape_cast %32 : vector<2x8x8xf32> to vector<16x8xf32>
    %34 = vector.extract_strided_slice %12 {offsets = [0, 8], sizes = [16, 8], strides = [1, 1]} : vector<16x32xf32> to vector<16x8xf32>
    %35 = vector.shape_cast %34 : vector<16x8xf32> to vector<2x8x8xf32>
    %36 = vector.extract_strided_slice %13 {offsets = [0, 8], sizes = [16, 8], strides = [1, 1]} : vector<16x32xf32> to vector<16x8xf32>
    %37 = vector.shape_cast %36 : vector<16x8xf32> to vector<2x8x8xf32>
    %38 = vector.extract_strided_slice %14 {offsets = [0, 8], sizes = [16, 8], strides = [1, 1]} : vector<16x32xf32> to vector<16x8xf32>
    %39 = vector.shape_cast %38 : vector<16x8xf32> to vector<2x8x8xf32>
    "tpu.trace_start"() <{level = 10 : i32, message = "bqe,bke->bqk"}> : () -> ()
    %cst_13 = arith.constant dense<0.000000e+00> : vector<2x8x8xf32>
    %40 = tpu.matmul %35, %37, %cst_13 {dimension_numbers = #tpu.dot_dimension_numbers<[2], [2], [1], [1], [0, 0, 0, 1, 1, 1], [0], [0]>} : vector<2x8x8xf32>, vector<2x8x8xf32>, vector<2x8x8xf32> -> vector<2x8x8xf32>
    "tpu.trace_stop"() : () -> ()
    %cst_14 = arith.constant dense<0xFF800000> : vector<2x8xf32>
    %41 = vector.multi_reduction <maximumf>, %40, %cst_14 [2] : vector<2x8x8xf32> to vector<2x8xf32>
    %42 = vector.shape_cast %41 : vector<2x8xf32> to vector<2x8x1xf32>
    %43 = vector.broadcast %42 : vector<2x8x1xf32> to vector<2x8x8xf32>
    %44 = arith.subf %40, %43 : vector<2x8x8xf32>
    %45 = math.exp %44 : vector<2x8x8xf32>
    %cst_15 = arith.constant dense<0.000000e+00> : vector<2x8xf32>
    %46 = vector.multi_reduction <add>, %45, %cst_15 [2] : vector<2x8x8xf32> to vector<2x8xf32>
    %47 = vector.shape_cast %46 : vector<2x8xf32> to vector<2x8x1xf32>
    %48 = tpu.reciprocal %47 {approx = true} : vector<2x8x1xf32> -> vector<2x8x1xf32>
    %49 = vector.broadcast %48 : vector<2x8x1xf32> to vector<2x8x8xf32>
    %50 = arith.mulf %45, %49 : vector<2x8x8xf32>
    "tpu.trace_start"() <{level = 10 : i32, message = "bqk,bke->bqe"}> : () -> ()
    %cst_16 = arith.constant dense<0.000000e+00> : vector<2x8x8xf32>
    %51 = tpu.matmul %50, %39, %cst_16 {dimension_numbers = #tpu.dot_dimension_numbers<[2], [1], [1], [2], [0, 0, 0, 1, 1, 2], [0], [0]>} : vector<2x8x8xf32>, vector<2x8x8xf32>, vector<2x8x8xf32> -> vector<2x8x8xf32>
    "tpu.trace_stop"() : () -> ()
    %52 = vector.shape_cast %51 : vector<2x8x8xf32> to vector<16x8xf32>
    %53 = vector.extract_strided_slice %12 {offsets = [0, 16], sizes = [16, 8], strides = [1, 1]} : vector<16x32xf32> to vector<16x8xf32>
    %54 = vector.shape_cast %53 : vector<16x8xf32> to vector<2x8x8xf32>
    %55 = vector.extract_strided_slice %13 {offsets = [0, 16], sizes = [16, 8], strides = [1, 1]} : vector<16x32xf32> to vector<16x8xf32>
    %56 = vector.shape_cast %55 : vector<16x8xf32> to vector<2x8x8xf32>
    %57 = vector.extract_strided_slice %14 {offsets = [0, 16], sizes = [16, 8], strides = [1, 1]} : vector<16x32xf32> to vector<16x8xf32>
    %58 = vector.shape_cast %57 : vector<16x8xf32> to vector<2x8x8xf32>
    "tpu.trace_start"() <{level = 10 : i32, message = "bqe,bke->bqk"}> : () -> ()
    %cst_17 = arith.constant dense<0.000000e+00> : vector<2x8x8xf32>
    %59 = tpu.matmul %54, %56, %cst_17 {dimension_numbers = #tpu.dot_dimension_numbers<[2], [2], [1], [1], [0, 0, 0, 1, 1, 1], [0], [0]>} : vector<2x8x8xf32>, vector<2x8x8xf32>, vector<2x8x8xf32> -> vector<2x8x8xf32>
    "tpu.trace_stop"() : () -> ()
    %cst_18 = arith.constant dense<0xFF800000> : vector<2x8xf32>
    %60 = vector.multi_reduction <maximumf>, %59, %cst_18 [2] : vector<2x8x8xf32> to vector<2x8xf32>
    %61 = vector.shape_cast %60 : vector<2x8xf32> to vector<2x8x1xf32>
    %62 = vector.broadcast %61 : vector<2x8x1xf32> to vector<2x8x8xf32>
    %63 = arith.subf %59, %62 : vector<2x8x8xf32>
    %64 = math.exp %63 : vector<2x8x8xf32>
    %cst_19 = arith.constant dense<0.000000e+00> : vector<2x8xf32>
    %65 = vector.multi_reduction <add>, %64, %cst_19 [2] : vector<2x8x8xf32> to vector<2x8xf32>
    %66 = vector.shape_cast %65 : vector<2x8xf32> to vector<2x8x1xf32>
    %67 = tpu.reciprocal %66 {approx = true} : vector<2x8x1xf32> -> vector<2x8x1xf32>
    %68 = vector.broadcast %67 : vector<2x8x1xf32> to vector<2x8x8xf32>
    %69 = arith.mulf %64, %68 : vector<2x8x8xf32>
    "tpu.trace_start"() <{level = 10 : i32, message = "bqk,bke->bqe"}> : () -> ()
    %cst_20 = arith.constant dense<0.000000e+00> : vector<2x8x8xf32>
    %70 = tpu.matmul %69, %58, %cst_20 {dimension_numbers = #tpu.dot_dimension_numbers<[2], [1], [1], [2], [0, 0, 0, 1, 1, 2], [0], [0]>} : vector<2x8x8xf32>, vector<2x8x8xf32>, vector<2x8x8xf32> -> vector<2x8x8xf32>
    "tpu.trace_stop"() : () -> ()
    %71 = vector.shape_cast %70 : vector<2x8x8xf32> to vector<16x8xf32>
    %72 = vector.extract_strided_slice %12 {offsets = [0, 24], sizes = [16, 8], strides = [1, 1]} : vector<16x32xf32> to vector<16x8xf32>
    %73 = vector.shape_cast %72 : vector<16x8xf32> to vector<2x8x8xf32>
    %74 = vector.extract_strided_slice %13 {offsets = [0, 24], sizes = [16, 8], strides = [1, 1]} : vector<16x32xf32> to vector<16x8xf32>
    %75 = vector.shape_cast %74 : vector<16x8xf32> to vector<2x8x8xf32>
    %76 = vector.extract_strided_slice %14 {offsets = [0, 24], sizes = [16, 8], strides = [1, 1]} : vector<16x32xf32> to vector<16x8xf32>
    %77 = vector.shape_cast %76 : vector<16x8xf32> to vector<2x8x8xf32>
    "tpu.trace_start"() <{level = 10 : i32, message = "bqe,bke->bqk"}> : () -> ()
    %cst_21 = arith.constant dense<0.000000e+00> : vector<2x8x8xf32>
    %78 = tpu.matmul %73, %75, %cst_21 {dimension_numbers = #tpu.dot_dimension_numbers<[2], [2], [1], [1], [0, 0, 0, 1, 1, 1], [0], [0]>} : vector<2x8x8xf32>, vector<2x8x8xf32>, vector<2x8x8xf32> -> vector<2x8x8xf32>
    "tpu.trace_stop"() : () -> ()
    %cst_22 = arith.constant dense<0xFF800000> : vector<2x8xf32>
    %79 = vector.multi_reduction <maximumf>, %78, %cst_22 [2] : vector<2x8x8xf32> to vector<2x8xf32>
    %80 = vector.shape_cast %79 : vector<2x8xf32> to vector<2x8x1xf32>
    %81 = vector.broadcast %80 : vector<2x8x1xf32> to vector<2x8x8xf32>
    %82 = arith.subf %78, %81 : vector<2x8x8xf32>
    %83 = math.exp %82 : vector<2x8x8xf32>
    %cst_23 = arith.constant dense<0.000000e+00> : vector<2x8xf32>
    %84 = vector.multi_reduction <add>, %83, %cst_23 [2] : vector<2x8x8xf32> to vector<2x8xf32>
    %85 = vector.shape_cast %84 : vector<2x8xf32> to vector<2x8x1xf32>
    %86 = tpu.reciprocal %85 {approx = true} : vector<2x8x1xf32> -> vector<2x8x1xf32>
    %87 = vector.broadcast %86 : vector<2x8x1xf32> to vector<2x8x8xf32>
    %88 = arith.mulf %83, %87 : vector<2x8x8xf32>
    "tpu.trace_start"() <{level = 10 : i32, message = "bqk,bke->bqe"}> : () -> ()
    %cst_24 = arith.constant dense<0.000000e+00> : vector<2x8x8xf32>
    %89 = tpu.matmul %88, %77, %cst_24 {dimension_numbers = #tpu.dot_dimension_numbers<[2], [1], [1], [2], [0, 0, 0, 1, 1, 2], [0], [0]>} : vector<2x8x8xf32>, vector<2x8x8xf32>, vector<2x8x8xf32> -> vector<2x8x8xf32>
    "tpu.trace_stop"() : () -> ()
    %90 = vector.shape_cast %89 : vector<2x8x8xf32> to vector<16x8xf32>
    %91 = tpu.concatenate %33, %52, %71, %90 in 1 : vector<16x8xf32>, vector<16x8xf32>, vector<16x8xf32>, vector<16x8xf32> -> vector<16x32xf32>
    %c0_25 = arith.constant 0 : index
    %c0_26 = arith.constant 0 : index
    %c0_27 = arith.constant 0 : index
    %92 = vector.load %arg5[%c0_25, %c0_26, %c0_27] : memref<1x32x32xf32, #tpu.memory_space<vmem>>, vector<1x32x32xf32>
    %93 = vector.shape_cast %92 : vector<1x32x32xf32> to vector<32x32xf32>
    %cst_28 = arith.constant dense<0.000000e+00> : vector<16x32xf32>
    %94 = tpu.matmul %91, %93, %cst_28 {dimension_numbers = #tpu.dot_dimension_numbers<[1], [0], [0], [1], [0, 0, 1, 1], [], []>} : vector<16x32xf32>, vector<32x32xf32>, vector<16x32xf32> -> vector<16x32xf32>
    %c0_29 = arith.constant 0 : index
    %c0_30 = arith.constant 0 : index
    %c0_31 = arith.constant 0 : index
    %95 = vector.load %arg6[%c0_29, %c0_30, %c0_31] : memref<1x1x32xf32, #tpu.memory_space<vmem>>, vector<1x1x32xf32>
    %96 = vector.shape_cast %95 : vector<1x1x32xf32> to vector<1x32xf32>
    %97 = vector.broadcast %96 : vector<1x32xf32> to vector<16x32xf32>
    %98 = arith.addf %94, %97 : vector<16x32xf32>
    %99 = arith.addf %4, %98 : vector<16x32xf32>
    %c0_32 = arith.constant 0 : index
    %c0_33 = arith.constant 0 : index
    %c0_34 = arith.constant 0 : index
    %100 = vector.load %arg7[%c0_32, %c0_33, %c0_34] : memref<1x1x32xf32, #tpu.memory_space<vmem>>, vector<1x1x32xf32>
    %101 = vector.shape_cast %100 : vector<1x1x32xf32> to vector<1x32xf32>
    %c0_35 = arith.constant 0 : index
    %c0_36 = arith.constant 0 : index
    %c0_37 = arith.constant 0 : index
    %102 = vector.load %arg8[%c0_35, %c0_36, %c0_37] : memref<1x1x32xf32, #tpu.memory_space<vmem>>, vector<1x1x32xf32>
    %103 = vector.shape_cast %102 : vector<1x1x32xf32> to vector<1x32xf32>
    %cst_38 = arith.constant dense<0.000000e+00> : vector<16xf32>
    %104 = vector.multi_reduction <add>, %99, %cst_38 [1] : vector<16x32xf32> to vector<16xf32>
    %105 = vector.shape_cast %104 : vector<16xf32> to vector<16x1xf32>
    %cst_39 = arith.constant 3.200000e+01 : f32
    %106 = vector.broadcast %cst_39 : f32 to vector<16x1xf32>
    %107 = arith.divf %105, %106 : vector<16x1xf32>
    %108 = vector.broadcast %107 : vector<16x1xf32> to vector<16x32xf32>
    %109 = arith.subf %99, %108 : vector<16x32xf32>
    %110 = arith.mulf %109, %109 : vector<16x32xf32>
    %cst_40 = arith.constant dense<0.000000e+00> : vector<16xf32>
    %111 = vector.multi_reduction <add>, %110, %cst_40 [1] : vector<16x32xf32> to vector<16xf32>
    %112 = vector.shape_cast %111 : vector<16xf32> to vector<16x1xf32>
    %cst_41 = arith.constant 3.200000e+01 : f32
    %113 = vector.broadcast %cst_41 : f32 to vector<16x1xf32>
    %114 = arith.divf %112, %113 : vector<16x1xf32>
    %115 = vector.broadcast %107 : vector<16x1xf32> to vector<16x32xf32>
    %116 = arith.subf %99, %115 : vector<16x32xf32>
    %cst_42 = arith.constant 9.99999974E-6 : f32
    %117 = vector.broadcast %cst_42 : f32 to vector<16x1xf32>
    %118 = arith.addf %114, %117 : vector<16x1xf32>
    %119 = math.rsqrt %118 : vector<16x1xf32>
    %120 = vector.broadcast %119 : vector<16x1xf32> to vector<16x32xf32>
    %121 = arith.mulf %116, %120 : vector<16x32xf32>
    %122 = vector.broadcast %101 : vector<1x32xf32> to vector<16x32xf32>
    %123 = arith.mulf %121, %122 : vector<16x32xf32>
    %124 = vector.broadcast %103 : vector<1x32xf32> to vector<16x32xf32>
    %125 = arith.addf %123, %124 : vector<16x32xf32>
    %c0_43 = arith.constant 0 : index
    %c0_44 = arith.constant 0 : index
    %c0_45 = arith.constant 0 : index
    %126 = vector.load %arg9[%c0_43, %c0_44, %c0_45] : memref<1x32x64xf32, #tpu.memory_space<vmem>>, vector<1x32x64xf32>
    %127 = vector.shape_cast %126 : vector<1x32x64xf32> to vector<32x64xf32>
    %cst_46 = arith.constant dense<0.000000e+00> : vector<16x64xf32>
    %128 = tpu.matmul %125, %127, %cst_46 {dimension_numbers = #tpu.dot_dimension_numbers<[1], [0], [0], [1], [0, 0, 1, 1], [], []>} : vector<16x32xf32>, vector<32x64xf32>, vector<16x64xf32> -> vector<16x64xf32>
    %c0_47 = arith.constant 0 : index
    %c0_48 = arith.constant 0 : index
    %c0_49 = arith.constant 0 : index
    %129 = vector.load %arg10[%c0_47, %c0_48, %c0_49] : memref<1x1x64xf32, #tpu.memory_space<vmem>>, vector<1x1x64xf32>
    %130 = vector.shape_cast %129 : vector<1x1x64xf32> to vector<1x64xf32>
    %131 = vector.broadcast %130 : vector<1x64xf32> to vector<16x64xf32>
    %132 = arith.addf %128, %131 : vector<16x64xf32>
    %cst_50 = arith.constant 0.000000e+00 : f32
    %133 = vector.broadcast %cst_50 : f32 to vector<16x64xf32>
    %134 = arith.maximumf %132, %133 : vector<16x64xf32>
    %c0_51 = arith.constant 0 : index
    %c0_52 = arith.constant 0 : index
    %c0_53 = arith.constant 0 : index
    %135 = vector.load %arg11[%c0_51, %c0_52, %c0_53] : memref<1x64x32xf32, #tpu.memory_space<vmem>>, vector<1x64x32xf32>
    %136 = vector.shape_cast %135 : vector<1x64x32xf32> to vector<64x32xf32>
    %cst_54 = arith.constant dense<0.000000e+00> : vector<16x32xf32>
    %137 = tpu.matmul %134, %136, %cst_54 {dimension_numbers = #tpu.dot_dimension_numbers<[1], [0], [0], [1], [0, 0, 1, 1], [], []>} : vector<16x64xf32>, vector<64x32xf32>, vector<16x32xf32> -> vector<16x32xf32>
    %c0_55 = arith.constant 0 : index
    %c0_56 = arith.constant 0 : index
    %c0_57 = arith.constant 0 : index
    %138 = vector.load %arg12[%c0_55, %c0_56, %c0_57] : memref<1x1x32xf32, #tpu.memory_space<vmem>>, vector<1x1x32xf32>
    %139 = vector.shape_cast %138 : vector<1x1x32xf32> to vector<1x32xf32>
    %140 = vector.broadcast %139 : vector<1x32xf32> to vector<16x32xf32>
    %141 = arith.addf %137, %140 : vector<16x32xf32>
    %142 = arith.addf %125, %141 : vector<16x32xf32>
    %c0_58 = arith.constant 0 : index
    %c0_59 = arith.constant 0 : index
    %c0_60 = arith.constant 0 : index
    %143 = vector.load %arg13[%c0_58, %c0_59, %c0_60] : memref<1x1x32xf32, #tpu.memory_space<vmem>>, vector<1x1x32xf32>
    %144 = vector.shape_cast %143 : vector<1x1x32xf32> to vector<1x32xf32>
    %c0_61 = arith.constant 0 : index
    %c0_62 = arith.constant 0 : index
    %c0_63 = arith.constant 0 : index
    %145 = vector.load %arg14[%c0_61, %c0_62, %c0_63] : memref<1x1x32xf32, #tpu.memory_space<vmem>>, vector<1x1x32xf32>
    %146 = vector.shape_cast %145 : vector<1x1x32xf32> to vector<1x32xf32>
    %cst_64 = arith.constant dense<0.000000e+00> : vector<16xf32>
    %147 = vector.multi_reduction <add>, %142, %cst_64 [1] : vector<16x32xf32> to vector<16xf32>
    %148 = vector.shape_cast %147 : vector<16xf32> to vector<16x1xf32>
    %cst_65 = arith.constant 3.200000e+01 : f32
    %149 = vector.broadcast %cst_65 : f32 to vector<16x1xf32>
    %150 = arith.divf %148, %149 : vector<16x1xf32>
    %151 = vector.broadcast %150 : vector<16x1xf32> to vector<16x32xf32>
    %152 = arith.subf %142, %151 : vector<16x32xf32>
    %153 = arith.mulf %152, %152 : vector<16x32xf32>
    %cst_66 = arith.constant dense<0.000000e+00> : vector<16xf32>
    %154 = vector.multi_reduction <add>, %153, %cst_66 [1] : vector<16x32xf32> to vector<16xf32>
    %155 = vector.shape_cast %154 : vector<16xf32> to vector<16x1xf32>
    %cst_67 = arith.constant 3.200000e+01 : f32
    %156 = vector.broadcast %cst_67 : f32 to vector<16x1xf32>
    %157 = arith.divf %155, %156 : vector<16x1xf32>
    %158 = vector.broadcast %150 : vector<16x1xf32> to vector<16x32xf32>
    %159 = arith.subf %142, %158 : vector<16x32xf32>
    %cst_68 = arith.constant 9.99999974E-6 : f32
    %160 = vector.broadcast %cst_68 : f32 to vector<16x1xf32>
    %161 = arith.addf %157, %160 : vector<16x1xf32>
    %162 = math.rsqrt %161 : vector<16x1xf32>
    %163 = vector.broadcast %162 : vector<16x1xf32> to vector<16x32xf32>
    %164 = arith.mulf %159, %163 : vector<16x32xf32>
    %165 = vector.broadcast %144 : vector<1x32xf32> to vector<16x32xf32>
    %166 = arith.mulf %164, %165 : vector<16x32xf32>
    %167 = vector.broadcast %146 : vector<1x32xf32> to vector<16x32xf32>
    %168 = arith.addf %166, %167 : vector<16x32xf32>
    %169 = vector.shape_cast %168 : vector<16x32xf32> to vector<2x8x32xf32>
    %c0_69 = arith.constant 0 : index
    %c0_70 = arith.constant 0 : index
    %c0_71 = arith.constant 0 : index
    %170 = vector.load %arg16[%c0_69, %c0_70, %c0_71] : memref<2x8x32xf32, #tpu.memory_space<vmem>>, vector<2x8x32xf32>
    tpu.vector_store %arg16[%c0_69, %c0_70, %c0_71], %169 {strides = array<i32>} : memref<2x8x32xf32, #tpu.memory_space<vmem>>, vector<2x8x32xf32>,
    %c1_i32 = arith.constant 1 : i32
    %171 = arith.cmpi eq, %arg1, %c1_i32 : i32
    %172 = arith.extui %171 : i1 to i32
    %c0_i32_72 = arith.constant 0 : i32
    %173 = arith.cmpi ne, %172, %c0_i32_72 : i32
    scf.if %173 {
      %174 = vector.shape_cast %168 : vector<16x32xf32> to vector<2x8x32xf32>
      %cst_73 = arith.constant dense<0xFF800000> : vector<2x32xf32>
      %175 = vector.multi_reduction <maximumf>, %174, %cst_73 [1] : vector<2x8x32xf32> to vector<2x32xf32>
      %176 = vector.shape_cast %175 : vector<2x32xf32> to vector<2x1x32xf32>
      %c0_74 = arith.constant 0 : index
      %c0_75 = arith.constant 0 : index
      %c0_76 = arith.constant 0 : index
      %177 = vector.load %arg15[%c0_74, %c0_75, %c0_76] : memref<2x1x32xf32, #tpu.memory_space<vmem>>, vector<2x1x32xf32>
      tpu.vector_store %arg15[%c0_74, %c0_75, %c0_76], %176 {strides = array<i32>} : memref<2x1x32xf32, #tpu.memory_space<vmem>>, vector<2x1x32xf32>,
    } else {
    }
    return
  }
  func.func @transform_0(%arg0: i32, %arg1: i32) -> (i32, i32, i32) {
    %c0_i32 = arith.constant 0 : i32
    %c0_i32_0 = arith.constant 0 : i32
    %c0_i32_1 = arith.constant 0 : i32
    return %arg0, %c0_i32, %c0_i32_0 : i32, i32, i32
  }
  func.func @transform_1(%arg0: i32, %arg1: i32) -> (i32, i32, i32) {
    %c0_i32 = arith.constant 0 : i32
    %c0_i32_0 = arith.constant 0 : i32
    %c0_i32_1 = arith.constant 0 : i32
    return %arg1, %c0_i32, %c0_i32_0 : i32, i32, i32
  }
  func.func @transform_2(%arg0: i32, %arg1: i32) -> (i32, i32, i32) {
    %c0_i32 = arith.constant 0 : i32
    %c0_i32_0 = arith.constant 0 : i32
    %c0_i32_1 = arith.constant 0 : i32
    return %arg1, %c0_i32, %c0_i32_0 : i32, i32, i32
  }
  func.func @transform_3(%arg0: i32, %arg1: i32) -> (i32, i32, i32) {
    %c0_i32 = arith.constant 0 : i32
    %c0_i32_0 = arith.constant 0 : i32
    %c0_i32_1 = arith.constant 0 : i32
    return %arg1, %c0_i32, %c0_i32_0 : i32, i32, i32
  }
  func.func @transform_4(%arg0: i32, %arg1: i32) -> (i32, i32, i32) {
    %c0_i32 = arith.constant 0 : i32
    %c0_i32_0 = arith.constant 0 : i32
    %c0_i32_1 = arith.constant 0 : i32
    return %arg1, %c0_i32, %c0_i32_0 : i32, i32, i32
  }
  func.func @transform_5(%arg0: i32, %arg1: i32) -> (i32, i32, i32) {
    %c0_i32 = arith.constant 0 : i32
    %c0_i32_0 = arith.constant 0 : i32
    %c0_i32_1 = arith.constant 0 : i32
    return %arg1, %c0_i32, %c0_i32_0 : i32, i32, i32
  }
  func.func @transform_6(%arg0: i32, %arg1: i32) -> (i32, i32, i32) {
    %c0_i32 = arith.constant 0 : i32
    %c0_i32_0 = arith.constant 0 : i32
    %c0_i32_1 = arith.constant 0 : i32
    return %arg1, %c0_i32, %c0_i32_0 : i32, i32, i32
  }
  func.func @transform_7(%arg0: i32, %arg1: i32) -> (i32, i32, i32) {
    %c0_i32 = arith.constant 0 : i32
    %c0_i32_0 = arith.constant 0 : i32
    %c0_i32_1 = arith.constant 0 : i32
    return %arg1, %c0_i32, %c0_i32_0 : i32, i32, i32
  }
  func.func @transform_8(%arg0: i32, %arg1: i32) -> (i32, i32, i32) {
    %c0_i32 = arith.constant 0 : i32
    %c0_i32_0 = arith.constant 0 : i32
    %c0_i32_1 = arith.constant 0 : i32
    return %arg1, %c0_i32, %c0_i32_0 : i32, i32, i32
  }
  func.func @transform_9(%arg0: i32, %arg1: i32) -> (i32, i32, i32) {
    %c0_i32 = arith.constant 0 : i32
    %c0_i32_0 = arith.constant 0 : i32
    %c0_i32_1 = arith.constant 0 : i32
    return %arg1, %c0_i32, %c0_i32_0 : i32, i32, i32
  }
  func.func @transform_10(%arg0: i32, %arg1: i32) -> (i32, i32, i32) {
    %c0_i32 = arith.constant 0 : i32
    %c0_i32_0 = arith.constant 0 : i32
    %c0_i32_1 = arith.constant 0 : i32
    return %arg1, %c0_i32, %c0_i32_0 : i32, i32, i32
  }
  func.func @transform_11(%arg0: i32, %arg1: i32) -> (i32, i32, i32) {
    %c0_i32 = arith.constant 0 : i32
    %c0_i32_0 = arith.constant 0 : i32
    %c0_i32_1 = arith.constant 0 : i32
    return %arg1, %c0_i32, %c0_i32_0 : i32, i32, i32
  }
  func.func @transform_12(%arg0: i32, %arg1: i32) -> (i32, i32, i32) {
    %c0_i32 = arith.constant 0 : i32
    %c0_i32_0 = arith.constant 0 : i32
    %c0_i32_1 = arith.constant 0 : i32
    return %arg1, %c0_i32, %c0_i32_0 : i32, i32, i32
  }
  func.func @transform_13(%arg0: i32, %arg1: i32) -> (i32, i32, i32) {
    %c0_i32 = arith.constant 0 : i32
    %c0_i32_0 = arith.constant 0 : i32
    %c0_i32_1 = arith.constant 0 : i32
    return %arg0, %c0_i32, %c0_i32_0 : i32, i32, i32
  }
}

</mosaic_0001>

<llo_original>
// kernel: transformer_with_maxpool.1
$region0: #{transformer_with_maxpool.1}
  #allocation0 [shape = 'u32[]', space=smem, size = 0x4, offset = 0x4, fixed_abs, tag = 'smem constant byte address 0x4 - core index']
  #allocation1 [shape = 'u32[144,128]{1,0:T(1,128)}', space=vmem, size = 0x12000, scoped, tag = 'internal scratch']
  #allocation2 [shape = 'f32[2,8,32]{2,1,0:T(8,128)}', space=vmem, size = 0x2000, scoped, tag = 'scratch operand']
  %s0 = inlined_call_operand.vmem [shape: f32[2,8,32], index: 0, kind: input, shape index: {}]
  %s1 = inlined_call_operand.vmem [shape: f32[2,32,96], index: 1, kind: input, shape index: {}]
  %s2 = inlined_call_operand.vmem [shape: f32[2,1,96], index: 2, kind: input, shape index: {}]
  %s3 = inlined_call_operand.vmem [shape: f32[2,32,32], index: 3, kind: input, shape index: {}]
  %s4 = inlined_call_operand.vmem [shape: f32[2,1,32], index: 4, kind: input, shape index: {}]
  %s5 = inlined_call_operand.vmem [shape: f32[2,1,32], index: 5, kind: input, shape index: {}]
  %s6 = inlined_call_operand.vmem [shape: f32[2,1,32], index: 6, kind: input, shape index: {}]
  %s7 = inlined_call_operand.vmem [shape: f32[2,32,64], index: 7, kind: input, shape index: {}]
  %s8 = inlined_call_operand.vmem [shape: f32[2,1,64], index: 8, kind: input, shape index: {}]
  %s9 = inlined_call_operand.vmem [shape: f32[2,64,32], index: 9, kind: input, shape index: {}]
  %s10 = inlined_call_operand.vmem [shape: f32[2,1,32], index: 10, kind: input, shape index: {}]
  %s11 = inlined_call_operand.vmem [shape: f32[2,1,32], index: 11, kind: input, shape index: {}]
  %s12 = inlined_call_operand.vmem [shape: f32[2,1,32], index: 12, kind: input, shape index: {}]
  %s13 = inlined_call_operand.hbm [shape: f32[2,1,32], index: 13, kind: output, shape index: {}]
  %s14 = sld [smem:[#allocation0]]
  $region93: #{transformer_with_maxpool.1} parent=0
    _
  %s16 = ssub.s32 1, %s14
  %s17 = scalar_select 0, %s16, %s14
  $region1: #{transformer_with_maxpool.1} parent=0
    #allocation3 [shape = 'u8[1024]{0}', space=vmem, size = 0x400, scoped, tag = 'output window, operand 0, single buffered']
    #allocation4 [shape = 's32[2]{0}', space=sflag, size = 0x8, scoped, tag = 'scoped memory for transformer_with_maxpool.1']
    %18 = vsyncpa [#allocation4], 0
    loop: start=0, step=1, limit=4
    $region2: #{transformer_with_maxpool.1} parent=1 // loop_pre_header
      _
    $region3: #{transformer_with_maxpool.1} parent=1 // loop_header
      %s20 = sphi 0, %s24
      %p21 = scmp.ge.s32.totalorder %s20, 4
      %s27 = sphi 0, %s39
      %s28 = sphi 0, %s35
      %s29 = sphi 0, %s27
      %s30 = sphi 0, %s28
      %s31 = sphi 0, %s29
      %s32 = sphi 0, %s30
      %s42 = sphi 0, %s44
      %s45 = sphi 0, %s42
      %s46 = sphi 0, %s45
      %s62 = sphi 0, %s46
      %s68 = sphi 0, %s70
      %s71 = sphi 0, %s68
      %s72 = sphi 0, %s71
      %s88 = sphi 0, %s72
      %s94 = sphi 0, %s96
      %s97 = sphi 0, %s94
      %s98 = sphi 0, %s97
      %s114 = sphi 0, %s98
      %s120 = sphi 0, %s122
      %s123 = sphi 0, %s120
      %s124 = sphi 0, %s123
      %s140 = sphi 0, %s124
      %s146 = sphi 0, %s148
      %s149 = sphi 0, %s146
      %s150 = sphi 0, %s149
      %s166 = sphi 0, %s150
      %s172 = sphi 0, %s174
      %s175 = sphi 0, %s172
      %s176 = sphi 0, %s175
      %s192 = sphi 0, %s176
      %s198 = sphi 0, %s200
      %s201 = sphi 0, %s198
      %s202 = sphi 0, %s201
      %s218 = sphi 0, %s202
      %s224 = sphi 0, %s226
      %s227 = sphi 0, %s224
      %s228 = sphi 0, %s227
      %s244 = sphi 0, %s228
      %s250 = sphi 0, %s252
      %s253 = sphi 0, %s250
      %s254 = sphi 0, %s253
      %s270 = sphi 0, %s254
      %s276 = sphi 0, %s278
      %s279 = sphi 0, %s276
      %s280 = sphi 0, %s279
      %s296 = sphi 0, %s280
      %s302 = sphi 0, %s304
      %s305 = sphi 0, %s302
      %s306 = sphi 0, %s305
      %s322 = sphi 0, %s306
      %s328 = sphi 0, %s330
      %s331 = sphi 0, %s328
      %s332 = sphi 0, %s331
      %s348 = sphi 0, %s332
      %s354 = sphi 0, %s356
      %s357 = sphi 0, %s354
      %s358 = sphi 0, %s357
      %s374 = sphi 0, %s358
      %s380 = sphi 0, %s382
      %s383 = sphi 0, %s380
      %s384 = sphi 0, %s383
      %s400 = sphi 0, %s384
    $region4: #{transformer_with_maxpool.1} parent=1 // loop_header_branch
      %23 = sbr.rel (%p21) target = $region8
    $region5: #{transformer_with_maxpool.1} parent=1 // loop_body
      %s25 = ssub.s32 %s20, 1
      %s26 = ssub.s32 %s20, 2
      %s33 = sadd.s32 1, %s28
      %p34 = scmp.ge.s32.totalorder %s33, 2
      %s35 = scalar_select %p34, 0, %s33
      %s36 = sadd.s32 1, %s27
      %s37 = scalar_select %p34, %s36, %s27
      %p38 = scmp.ge.s32.totalorder %s37, 1
      %s39 = scalar_select %p38, 0, %s37
      %s40 = ssub.s32 %s27, %s39
      %p41 = scmp.eq.s32.totalorder %s40, 0
      %s43 = sadd.s32 %s42, 1
      %s44 = scalar_select %p41, %s42, %s43
      %p47 = pneg %p41
      %p48 = scmp.eq.s32.totalorder %s20, 1
      %p49 = por %p47, %p48
      %p50 = scmp.ne.s32.totalorder %s42, %s45
      %p51 = scmp.eq.s32.totalorder %s20, 0
      %p52 = por %p50, %p51
      %p53 = scmp.ne.s32.totalorder %s42, %s45
      %p54 = scmp.eq.s32.totalorder %s25, 1
      %p55 = por %p53, %p54
      %p56 = scmp.ne.s32.totalorder %s45, %s46
      %p57 = scmp.eq.s32.totalorder %s25, 0
      %p58 = por %p56, %p57
      %p59 = scmp.ne.s32.totalorder %s45, %s46
      %p60 = scmp.eq.s32.totalorder %s26, 1
      %p61 = por %p59, %p60
      %p63 = scmp.ne.s32.totalorder %s46, %s62
      %p64 = scmp.eq.s32.totalorder %s26, 0
      %p65 = por %p63, %p64
      %s66 = ssub.s32 %s28, %s35
      %p67 = scmp.eq.s32.totalorder %s66, 0
      %s69 = sadd.s32 %s68, 1
      %s70 = scalar_select %p67, %s68, %s69
      %p73 = pneg %p67
      %p74 = scmp.eq.s32.totalorder %s20, 1
      %p75 = por %p73, %p74
      %p76 = scmp.ne.s32.totalorder %s68, %s71
      %p77 = scmp.eq.s32.totalorder %s20, 0
      %p78 = por %p76, %p77
      %p79 = scmp.ne.s32.totalorder %s68, %s71
      %p80 = scmp.eq.s32.totalorder %s25, 1
      %p81 = por %p79, %p80
      %p82 = scmp.ne.s32.totalorder %s71, %s72
      %p83 = scmp.eq.s32.totalorder %s25, 0
      %p84 = por %p82, %p83
      %p85 = scmp.ne.s32.totalorder %s71, %s72
      %p86 = scmp.eq.s32.totalorder %s26, 1
      %p87 = por %p85, %p86
      %p89 = scmp.ne.s32.totalorder %s72, %s88
      %p90 = scmp.eq.s32.totalorder %s26, 0
      %p91 = por %p89, %p90
      %s92 = ssub.s32 %s28, %s35
      %p93 = scmp.eq.s32.totalorder %s92, 0
      %s95 = sadd.s32 %s94, 1
      %s96 = scalar_select %p93, %s94, %s95
      %p99 = pneg %p93
      %p100 = scmp.eq.s32.totalorder %s20, 1
      %p101 = por %p99, %p100
      %p102 = scmp.ne.s32.totalorder %s94, %s97
      %p103 = scmp.eq.s32.totalorder %s20, 0
      %p104 = por %p102, %p103
      %p105 = scmp.ne.s32.totalorder %s94, %s97
      %p106 = scmp.eq.s32.totalorder %s25, 1
      %p107 = por %p105, %p106
      %p108 = scmp.ne.s32.totalorder %s97, %s98
      %p109 = scmp.eq.s32.totalorder %s25, 0
      %p110 = por %p108, %p109
      %p111 = scmp.ne.s32.totalorder %s97, %s98
      %p112 = scmp.eq.s32.totalorder %s26, 1
      %p113 = por %p111, %p112
      %p115 = scmp.ne.s32.totalorder %s98, %s114
      %p116 = scmp.eq.s32.totalorder %s26, 0
      %p117 = por %p115, %p116
      %s118 = ssub.s32 %s28, %s35
      %p119 = scmp.eq.s32.totalorder %s118, 0
      %s121 = sadd.s32 %s120, 1
      %s122 = scalar_select %p119, %s120, %s121
      %p125 = pneg %p119
      %p126 = scmp.eq.s32.totalorder %s20, 1
      %p127 = por %p125, %p126
      %p128 = scmp.ne.s32.totalorder %s120, %s123
      %p129 = scmp.eq.s32.totalorder %s20, 0
      %p130 = por %p128, %p129
      %p131 = scmp.ne.s32.totalorder %s120, %s123
      %p132 = scmp.eq.s32.totalorder %s25, 1
      %p133 = por %p131, %p132
      %p134 = scmp.ne.s32.totalorder %s123, %s124
      %p135 = scmp.eq.s32.totalorder %s25, 0
      %p136 = por %p134, %p135
      %p137 = scmp.ne.s32.totalorder %s123, %s124
      %p138 = scmp.eq.s32.totalorder %s26, 1
      %p139 = por %p137, %p138
      %p141 = scmp.ne.s32.totalorder %s124, %s140
      %p142 = scmp.eq.s32.totalorder %s26, 0
      %p143 = por %p141, %p142
      %s144 = ssub.s32 %s28, %s35
      %p145 = scmp.eq.s32.totalorder %s144, 0
      %s147 = sadd.s32 %s146, 1
      %s148 = scalar_select %p145, %s146, %s147
      %p151 = pneg %p145
      %p152 = scmp.eq.s32.totalorder %s20, 1
      %p153 = por %p151, %p152
      %p154 = scmp.ne.s32.totalorder %s146, %s149
      %p155 = scmp.eq.s32.totalorder %s20, 0
      %p156 = por %p154, %p155
      %p157 = scmp.ne.s32.totalorder %s146, %s149
      %p158 = scmp.eq.s32.totalorder %s25, 1
      %p159 = por %p157, %p158
      %p160 = scmp.ne.s32.totalorder %s149, %s150
      %p161 = scmp.eq.s32.totalorder %s25, 0
      %p162 = por %p160, %p161
      %p163 = scmp.ne.s32.totalorder %s149, %s150
      %p164 = scmp.eq.s32.totalorder %s26, 1
      %p165 = por %p163, %p164
      %p167 = scmp.ne.s32.totalorder %s150, %s166
      %p168 = scmp.eq.s32.totalorder %s26, 0
      %p169 = por %p167, %p168
      %s170 = ssub.s32 %s28, %s35
      %p171 = scmp.eq.s32.totalorder %s170, 0
      %s173 = sadd.s32 %s172, 1
      %s174 = scalar_select %p171, %s172, %s173
      %p177 = pneg %p171
      %p178 = scmp.eq.s32.totalorder %s20, 1
      %p179 = por %p177, %p178
      %p180 = scmp.ne.s32.totalorder %s172, %s175
      %p181 = scmp.eq.s32.totalorder %s20, 0
      %p182 = por %p180, %p181
      %p183 = scmp.ne.s32.totalorder %s172, %s175
      %p184 = scmp.eq.s32.totalorder %s25, 1
      %p185 = por %p183, %p184
      %p186 = scmp.ne.s32.totalorder %s175, %s176
      %p187 = scmp.eq.s32.totalorder %s25, 0
      %p188 = por %p186, %p187
      %p189 = scmp.ne.s32.totalorder %s175, %s176
      %p190 = scmp.eq.s32.totalorder %s26, 1
      %p191 = por %p189, %p190
      %p193 = scmp.ne.s32.totalorder %s176, %s192
      %p194 = scmp.eq.s32.totalorder %s26, 0
      %p195 = por %p193, %p194
      %s196 = ssub.s32 %s28, %s35
      %p197 = scmp.eq.s32.totalorder %s196, 0
      %s199 = sadd.s32 %s198, 1
      %s200 = scalar_select %p197, %s198, %s199
      %p203 = pneg %p197
      %p204 = scmp.eq.s32.totalorder %s20, 1
      %p205 = por %p203, %p204
      %p206 = scmp.ne.s32.totalorder %s198, %s201
      %p207 = scmp.eq.s32.totalorder %s20, 0
      %p208 = por %p206, %p207
      %p209 = scmp.ne.s32.totalorder %s198, %s201
      %p210 = scmp.eq.s32.totalorder %s25, 1
      %p211 = por %p209, %p210
      %p212 = scmp.ne.s32.totalorder %s201, %s202
      %p213 = scmp.eq.s32.totalorder %s25, 0
      %p214 = por %p212, %p213
      %p215 = scmp.ne.s32.totalorder %s201, %s202
      %p216 = scmp.eq.s32.totalorder %s26, 1
      %p217 = por %p215, %p216
      %p219 = scmp.ne.s32.totalorder %s202, %s218
      %p220 = scmp.eq.s32.totalorder %s26, 0
      %p221 = por %p219, %p220
      %s222 = ssub.s32 %s28, %s35
      %p223 = scmp.eq.s32.totalorder %s222, 0
      %s225 = sadd.s32 %s224, 1
      %s226 = scalar_select %p223, %s224, %s225
      %p229 = pneg %p223
      %p230 = scmp.eq.s32.totalorder %s20, 1
      %p231 = por %p229, %p230
      %p232 = scmp.ne.s32.totalorder %s224, %s227
      %p233 = scmp.eq.s32.totalorder %s20, 0
      %p234 = por %p232, %p233
      %p235 = scmp.ne.s32.totalorder %s224, %s227
      %p236 = scmp.eq.s32.totalorder %s25, 1
      %p237 = por %p235, %p236
      %p238 = scmp.ne.s32.totalorder %s227, %s228
      %p239 = scmp.eq.s32.totalorder %s25, 0
      %p240 = por %p238, %p239
      %p241 = scmp.ne.s32.totalorder %s227, %s228
      %p242 = scmp.eq.s32.totalorder %s26, 1
      %p243 = por %p241, %p242
      %p245 = scmp.ne.s32.totalorder %s228, %s244
      %p246 = scmp.eq.s32.totalorder %s26, 0
      %p247 = por %p245, %p246
      %s248 = ssub.s32 %s28, %s35
      %p249 = scmp.eq.s32.totalorder %s248, 0
      %s251 = sadd.s32 %s250, 1
      %s252 = scalar_select %p249, %s250, %s251
      %p255 = pneg %p249
      %p256 = scmp.eq.s32.totalorder %s20, 1
      %p257 = por %p255, %p256
      %p258 = scmp.ne.s32.totalorder %s250, %s253
      %p259 = scmp.eq.s32.totalorder %s20, 0
      %p260 = por %p258, %p259
      %p261 = scmp.ne.s32.totalorder %s250, %s253
      %p262 = scmp.eq.s32.totalorder %s25, 1
      %p263 = por %p261, %p262
      %p264 = scmp.ne.s32.totalorder %s253, %s254
      %p265 = scmp.eq.s32.totalorder %s25, 0
      %p266 = por %p264, %p265
      %p267 = scmp.ne.s32.totalorder %s253, %s254
      %p268 = scmp.eq.s32.totalorder %s26, 1
      %p269 = por %p267, %p268
      %p271 = scmp.ne.s32.totalorder %s254, %s270
      %p272 = scmp.eq.s32.totalorder %s26, 0
      %p273 = por %p271, %p272
      %s274 = ssub.s32 %s28, %s35
      %p275 = scmp.eq.s32.totalorder %s274, 0
      %s277 = sadd.s32 %s276, 1
      %s278 = scalar_select %p275, %s276, %s277
      %p281 = pneg %p275
      %p282 = scmp.eq.s32.totalorder %s20, 1
      %p283 = por %p281, %p282
      %p284 = scmp.ne.s32.totalorder %s276, %s279
      %p285 = scmp.eq.s32.totalorder %s20, 0
      %p286 = por %p284, %p285
      %p287 = scmp.ne.s32.totalorder %s276, %s279
      %p288 = scmp.eq.s32.totalorder %s25, 1
      %p289 = por %p287, %p288
      %p290 = scmp.ne.s32.totalorder %s279, %s280
      %p291 = scmp.eq.s32.totalorder %s25, 0
      %p292 = por %p290, %p291
      %p293 = scmp.ne.s32.totalorder %s279, %s280
      %p294 = scmp.eq.s32.totalorder %s26, 1
      %p295 = por %p293, %p294
      %p297 = scmp.ne.s32.totalorder %s280, %s296
      %p298 = scmp.eq.s32.totalorder %s26, 0
      %p299 = por %p297, %p298
      %s300 = ssub.s32 %s28, %s35
      %p301 = scmp.eq.s32.totalorder %s300, 0
      %s303 = sadd.s32 %s302, 1
      %s304 = scalar_select %p301, %s302, %s303
      %p307 = pneg %p301
      %p308 = scmp.eq.s32.totalorder %s20, 1
      %p309 = por %p307, %p308
      %p310 = scmp.ne.s32.totalorder %s302, %s305
      %p311 = scmp.eq.s32.totalorder %s20, 0
      %p312 = por %p310, %p311
      %p313 = scmp.ne.s32.totalorder %s302, %s305
      %p314 = scmp.eq.s32.totalorder %s25, 1
      %p315 = por %p313, %p314
      %p316 = scmp.ne.s32.totalorder %s305, %s306
      %p317 = scmp.eq.s32.totalorder %s25, 0
      %p318 = por %p316, %p317
      %p319 = scmp.ne.s32.totalorder %s305, %s306
      %p320 = scmp.eq.s32.totalorder %s26, 1
      %p321 = por %p319, %p320
      %p323 = scmp.ne.s32.totalorder %s306, %s322
      %p324 = scmp.eq.s32.totalorder %s26, 0
      %p325 = por %p323, %p324
      %s326 = ssub.s32 %s28, %s35
      %p327 = scmp.eq.s32.totalorder %s326, 0
      %s329 = sadd.s32 %s328, 1
      %s330 = scalar_select %p327, %s328, %s329
      %p333 = pneg %p327
      %p334 = scmp.eq.s32.totalorder %s20, 1
      %p335 = por %p333, %p334
      %p336 = scmp.ne.s32.totalorder %s328, %s331
      %p337 = scmp.eq.s32.totalorder %s20, 0
      %p338 = por %p336, %p337
      %p339 = scmp.ne.s32.totalorder %s328, %s331
      %p340 = scmp.eq.s32.totalorder %s25, 1
      %p341 = por %p339, %p340
      %p342 = scmp.ne.s32.totalorder %s331, %s332
      %p343 = scmp.eq.s32.totalorder %s25, 0
      %p344 = por %p342, %p343
      %p345 = scmp.ne.s32.totalorder %s331, %s332
      %p346 = scmp.eq.s32.totalorder %s26, 1
      %p347 = por %p345, %p346
      %p349 = scmp.ne.s32.totalorder %s332, %s348
      %p350 = scmp.eq.s32.totalorder %s26, 0
      %p351 = por %p349, %p350
      %s352 = ssub.s32 %s28, %s35
      %p353 = scmp.eq.s32.totalorder %s352, 0
      %s355 = sadd.s32 %s354, 1
      %s356 = scalar_select %p353, %s354, %s355
      %p359 = pneg %p353
      %p360 = scmp.eq.s32.totalorder %s20, 1
      %p361 = por %p359, %p360
      %p362 = scmp.ne.s32.totalorder %s354, %s357
      %p363 = scmp.eq.s32.totalorder %s20, 0
      %p364 = por %p362, %p363
      %p365 = scmp.ne.s32.totalorder %s354, %s357
      %p366 = scmp.eq.s32.totalorder %s25, 1
      %p367 = por %p365, %p366
      %p368 = scmp.ne.s32.totalorder %s357, %s358
      %p369 = scmp.eq.s32.totalorder %s25, 0
      %p370 = por %p368, %p369
      %p371 = scmp.ne.s32.totalorder %s357, %s358
      %p372 = scmp.eq.s32.totalorder %s26, 1
      %p373 = por %p371, %p372
      %p375 = scmp.ne.s32.totalorder %s358, %s374
      %p376 = scmp.eq.s32.totalorder %s26, 0
      %p377 = por %p375, %p376
      %s378 = ssub.s32 %s27, %s39
      %p379 = scmp.eq.s32.totalorder %s378, 0
      %s381 = sadd.s32 %s380, 1
      %s382 = scalar_select %p379, %s380, %s381
      %p385 = pneg %p379
      %p386 = scmp.eq.s32.totalorder %s20, 1
      %p387 = por %p385, %p386
      %p388 = scmp.ne.s32.totalorder %s380, %s383
      %p389 = scmp.eq.s32.totalorder %s20, 0
      %p390 = por %p388, %p389
      %p391 = scmp.ne.s32.totalorder %s380, %s383
      %p392 = scmp.eq.s32.totalorder %s25, 1
      %p393 = por %p391, %p392
      %p394 = scmp.ne.s32.totalorder %s383, %s384
      %p395 = scmp.eq.s32.totalorder %s25, 0
      %p396 = por %p394, %p395
      %p397 = scmp.ne.s32.totalorder %s383, %s384
      %p398 = scmp.eq.s32.totalorder %s26, 1
      %p399 = por %p397, %p398
      %p401 = scmp.ne.s32.totalorder %s384, %s400
      %p402 = scmp.eq.s32.totalorder %s26, 0
      %p403 = por %p401, %p402
      %p404 = scmp.le.s32.totalorder 1, %s20
      %p405 = scmp.lt.s32.totalorder %s20, 3
      %p406 = pnand %p404, %p405
      %p407 = pneg %p406
      // Predicated region
      $region9: #{transformer_with_maxpool.1} parent=5 // pred_check
        _
      $region10: #{transformer_with_maxpool.1} parent=5 // pred_check_branch
        %409 = sbr.rel (%p406) target = $region12
      $region11: #{transformer_with_maxpool.1} parent=5 // pred_region
        %s410 = ssub.s32 %s20, 1
        // Predicated region
        $region13: #{transformer_with_maxpool.1} parent=11 // pred_check
          %p411 = pneg %p58
        $region14: #{transformer_with_maxpool.1} parent=11 // pred_check_branch
          %413 = sbr.rel (%p411) target = $region16
        $region15: #{transformer_with_maxpool.1} parent=11 // pred_region
          %s414 = smul.u32 2, %s29
          %p415 = scmp.lt.s32.totalorder %s414, 1
          %s416 = scalar_select %p415, %s414, 1
          %s417 = smul.addr %s416, 8
          %s418 = scalar_lea.vmem %s0, %s417
          %s419 = smul.u32 2, %s29
        $region16: #{transformer_with_maxpool.1} parent=11 // pred_fallthru
          _
      $region12: #{transformer_with_maxpool.1} parent=5 // pred_fallthru
        _
      %p420 = scmp.lt.s32.totalorder %s20, 2
      // Predicated region
      $region17: #{transformer_with_maxpool.1} parent=5 // pred_check
        %p421 = pneg %p420
      $region18: #{transformer_with_maxpool.1} parent=5 // pred_check_branch
        %423 = sbr.rel (%p421) target = $region20
      $region19: #{transformer_with_maxpool.1} parent=5 // pred_region
        // Predicated region
        $region21: #{transformer_with_maxpool.1} parent=19 // pred_check
          %p424 = pneg %p78
        $region22: #{transformer_with_maxpool.1} parent=19 // pred_check_branch
          %426 = sbr.rel (%p424) target = $region24
        $region23: #{transformer_with_maxpool.1} parent=19 // pred_region
          %p427 = scmp.lt.s32.totalorder %s28, 1
          %s428 = scalar_select %p427, %s28, 1
          %s429 = smul.addr %s428, 4
          %s430 = smul.addr %s429, 8
          %s431 = scalar_lea.vmem %s1, %s430
        $region24: #{transformer_with_maxpool.1} parent=19 // pred_fallthru
          _
        // Predicated region
        $region25: #{transformer_with_maxpool.1} parent=19 // pred_check
          %p432 = pneg %p104
        $region26: #{transformer_with_maxpool.1} parent=19 // pred_check_branch
          %434 = sbr.rel (%p432) target = $region28
        $region27: #{transformer_with_maxpool.1} parent=19 // pred_region
          %p435 = scmp.lt.s32.totalorder %s28, 1
          %s436 = scalar_select %p435, %s28, 1
          %s437 = scalar_lea.vmem %s2, %s436
        $region28: #{transformer_with_maxpool.1} parent=19 // pred_fallthru
          _
        // Predicated region
        $region29: #{transformer_with_maxpool.1} parent=19 // pred_check
          %p438 = pneg %p130
        $region30: #{transformer_with_maxpool.1} parent=19 // pred_check_branch
          %440 = sbr.rel (%p438) target = $region32
        $region31: #{transformer_with_maxpool.1} parent=19 // pred_region
          %p441 = scmp.lt.s32.totalorder %s28, 1
          %s442 = scalar_select %p441, %s28, 1
          %s443 = smul.addr %s442, 4
          %s444 = smul.addr %s443, 8
          %s445 = scalar_lea.vmem %s3, %s444
        $region32: #{transformer_with_maxpool.1} parent=19 // pred_fallthru
          _
        // Predicated region
        $region33: #{transformer_with_maxpool.1} parent=19 // pred_check
          %p446 = pneg %p156
        $region34: #{transformer_with_maxpool.1} parent=19 // pred_check_branch
          %448 = sbr.rel (%p446) target = $region36
        $region35: #{transformer_with_maxpool.1} parent=19 // pred_region
          %p449 = scmp.lt.s32.totalorder %s28, 1
          %s450 = scalar_select %p449, %s28, 1
          %s451 = scalar_lea.vmem %s4, %s450
        $region36: #{transformer_with_maxpool.1} parent=19 // pred_fallthru
          _
        // Predicated region
        $region37: #{transformer_with_maxpool.1} parent=19 // pred_check
          %p452 = pneg %p182
        $region38: #{transformer_with_maxpool.1} parent=19 // pred_check_branch
          %454 = sbr.rel (%p452) target = $region40
        $region39: #{transformer_with_maxpool.1} parent=19 // pred_region
          %p455 = scmp.lt.s32.totalorder %s28, 1
          %s456 = scalar_select %p455, %s28, 1
          %s457 = scalar_lea.vmem %s5, %s456
        $region40: #{transformer_with_maxpool.1} parent=19 // pred_fallthru
          _
        // Predicated region
        $region41: #{transformer_with_maxpool.1} parent=19 // pred_check
          %p458 = pneg %p208
        $region42: #{transformer_with_maxpool.1} parent=19 // pred_check_branch
          %460 = sbr.rel (%p458) target = $region44
        $region43: #{transformer_with_maxpool.1} parent=19 // pred_region
          %p461 = scmp.lt.s32.totalorder %s28, 1
          %s462 = scalar_select %p461, %s28, 1
          %s463 = scalar_lea.vmem %s6, %s462
        $region44: #{transformer_with_maxpool.1} parent=19 // pred_fallthru
          _
        // Predicated region
        $region45: #{transformer_with_maxpool.1} parent=19 // pred_check
          %p464 = pneg %p234
        $region46: #{transformer_with_maxpool.1} parent=19 // pred_check_branch
          %466 = sbr.rel (%p464) target = $region48
        $region47: #{transformer_with_maxpool.1} parent=19 // pred_region
          %p467 = scmp.lt.s32.totalorder %s28, 1
          %s468 = scalar_select %p467, %s28, 1
          %s469 = smul.addr %s468, 4
          %s470 = smul.addr %s469, 8
          %s471 = scalar_lea.vmem %s7, %s470
        $region48: #{transformer_with_maxpool.1} parent=19 // pred_fallthru
          _
        // Predicated region
        $region49: #{transformer_with_maxpool.1} parent=19 // pred_check
          %p472 = pneg %p260
        $region50: #{transformer_with_maxpool.1} parent=19 // pred_check_branch
          %474 = sbr.rel (%p472) target = $region52
        $region51: #{transformer_with_maxpool.1} parent=19 // pred_region
          %p475 = scmp.lt.s32.totalorder %s28, 1
          %s476 = scalar_select %p475, %s28, 1
          %s477 = scalar_lea.vmem %s8, %s476
        $region52: #{transformer_with_maxpool.1} parent=19 // pred_fallthru
          _
        // Predicated region
        $region53: #{transformer_with_maxpool.1} parent=19 // pred_check
          %p478 = pneg %p286
        $region54: #{transformer_with_maxpool.1} parent=19 // pred_check_branch
          %480 = sbr.rel (%p478) target = $region56
        $region55: #{transformer_with_maxpool.1} parent=19 // pred_region
          %p481 = scmp.lt.s32.totalorder %s28, 1
          %s482 = scalar_select %p481, %s28, 1
          %s483 = smul.addr %s482, 8
          %s484 = smul.addr %s483, 8
          %s485 = scalar_lea.vmem %s9, %s484
        $region56: #{transformer_with_maxpool.1} parent=19 // pred_fallthru
          _
        // Predicated region
        $region57: #{transformer_with_maxpool.1} parent=19 // pred_check
          %p486 = pneg %p312
        $region58: #{transformer_with_maxpool.1} parent=19 // pred_check_branch
          %488 = sbr.rel (%p486) target = $region60
        $region59: #{transformer_with_maxpool.1} parent=19 // pred_region
          %p489 = scmp.lt.s32.totalorder %s28, 1
          %s490 = scalar_select %p489, %s28, 1
          %s491 = scalar_lea.vmem %s10, %s490
        $region60: #{transformer_with_maxpool.1} parent=19 // pred_fallthru
          _
        // Predicated region
        $region61: #{transformer_with_maxpool.1} parent=19 // pred_check
          %p492 = pneg %p338
        $region62: #{transformer_with_maxpool.1} parent=19 // pred_check_branch
          %494 = sbr.rel (%p492) target = $region64
        $region63: #{transformer_with_maxpool.1} parent=19 // pred_region
          %p495 = scmp.lt.s32.totalorder %s28, 1
          %s496 = scalar_select %p495, %s28, 1
          %s497 = scalar_lea.vmem %s11, %s496
        $region64: #{transformer_with_maxpool.1} parent=19 // pred_fallthru
          _
        // Predicated region
        $region65: #{transformer_with_maxpool.1} parent=19 // pred_check
          %p498 = pneg %p364
        $region66: #{transformer_with_maxpool.1} parent=19 // pred_check_branch
          %500 = sbr.rel (%p498) target = $region68
        $region67: #{transformer_with_maxpool.1} parent=19 // pred_region
          %p501 = scmp.lt.s32.totalorder %s28, 1
          %s502 = scalar_select %p501, %s28, 1
          %s503 = scalar_lea.vmem %s12, %s502
        $region68: #{transformer_with_maxpool.1} parent=19 // pred_fallthru
          _
      $region20: #{transformer_with_maxpool.1} parent=5 // pred_fallthru
        _
      %p504 = scmp.le.s32.totalorder 1, %s20
      %p505 = scmp.lt.s32.totalorder %s20, 3
      %p506 = pnand %p504, %p505
      %p507 = pneg %p506
      // Predicated region
      $region69: #{transformer_with_maxpool.1} parent=5 // pred_check
        _
      $region70: #{transformer_with_maxpool.1} parent=5 // pred_check_branch
        %509 = sbr.rel (%p506) target = $region72
      $region71: #{transformer_with_maxpool.1} parent=5 // pred_region
        %s510 = ssub.s32 %s20, 1
        %s511 = smul.u32 2, %s29
        %p512 = scmp.lt.s32.totalorder %s511, 1
        %s513 = scalar_select %p512, %s511, 1
        %s514 = smul.addr %s513, 8
        %s515 = scalar_lea.vmem %s0, %s514
        %p516 = pneg %p58
        %p517 = pneg %p55
        %p518 = scmp.lt.s32.totalorder %s30, 1
        %s519 = scalar_select %p518, %s30, 1
        %s520 = smul.addr %s519, 4
        %s521 = smul.addr %s520, 8
        %s522 = scalar_lea.vmem %s1, %s521
        %p523 = pneg %p84
        %p524 = pneg %p81
        %p525 = scmp.lt.s32.totalorder %s30, 1
        %s526 = scalar_select %p525, %s30, 1
        %s527 = scalar_lea.vmem %s2, %s526
        %p528 = pneg %p110
        %p529 = pneg %p107
        %p530 = scmp.lt.s32.totalorder %s30, 1
        %s531 = scalar_select %p530, %s30, 1
        %s532 = smul.addr %s531, 4
        %s533 = smul.addr %s532, 8
        %s534 = scalar_lea.vmem %s3, %s533
        %p535 = pneg %p136
        %p536 = pneg %p133
        %p537 = scmp.lt.s32.totalorder %s30, 1
        %s538 = scalar_select %p537, %s30, 1
        %s539 = scalar_lea.vmem %s4, %s538
        %p540 = pneg %p162
        %p541 = pneg %p159
        %p542 = scmp.lt.s32.totalorder %s30, 1
        %s543 = scalar_select %p542, %s30, 1
        %s544 = scalar_lea.vmem %s5, %s543
        %p545 = pneg %p188
        %p546 = pneg %p185
        %p547 = scmp.lt.s32.totalorder %s30, 1
        %s548 = scalar_select %p547, %s30, 1
        %s549 = scalar_lea.vmem %s6, %s548
        %p550 = pneg %p214
        %p551 = pneg %p211
        %p552 = scmp.lt.s32.totalorder %s30, 1
        %s553 = scalar_select %p552, %s30, 1
        %s554 = smul.addr %s553, 4
        %s555 = smul.addr %s554, 8
        %s556 = scalar_lea.vmem %s7, %s555
        %p557 = pneg %p240
        %p558 = pneg %p237
        %p559 = scmp.lt.s32.totalorder %s30, 1
        %s560 = scalar_select %p559, %s30, 1
        %s561 = scalar_lea.vmem %s8, %s560
        %p562 = pneg %p266
        %p563 = pneg %p263
        %p564 = scmp.lt.s32.totalorder %s30, 1
        %s565 = scalar_select %p564, %s30, 1
        %s566 = smul.addr %s565, 8
        %s567 = smul.addr %s566, 8
        %s568 = scalar_lea.vmem %s9, %s567
        %p569 = pneg %p292
        %p570 = pneg %p289
        %p571 = scmp.lt.s32.totalorder %s30, 1
        %s572 = scalar_select %p571, %s30, 1
        %s573 = scalar_lea.vmem %s10, %s572
        %p574 = pneg %p318
        %p575 = pneg %p315
        %p576 = scmp.lt.s32.totalorder %s30, 1
        %s577 = scalar_select %p576, %s30, 1
        %s578 = scalar_lea.vmem %s11, %s577
        %p579 = pneg %p344
        %p580 = pneg %p341
        %p581 = scmp.lt.s32.totalorder %s30, 1
        %s582 = scalar_select %p581, %s30, 1
        %s583 = scalar_lea.vmem %s12, %s582
        %p584 = pneg %p370
        %p585 = pneg %p367
        %p586 = pneg %p396
        %p587 = pneg %p393
        %s588 = smul.u32 2, %s29
        %p589 = scmp.lt.s32.totalorder %s588, 1
        %s590 = scalar_select %p589, %s588, 1
        %s591 = smul.addr %s590, 8
        %s592 = scalar_lea.vmem %s0, %s591
        %s593 = smul.u32 2, %s29
        %p594 = scmp.lt.s32.totalorder %s30, 1
        %s595 = scalar_select %p594, %s30, 1
        %s596 = smul.addr %s595, 4
        %s597 = smul.addr %s596, 8
        %s598 = scalar_lea.vmem %s1, %s597
        %p599 = scmp.lt.s32.totalorder %s30, 1
        %s600 = scalar_select %p599, %s30, 1
        %s601 = scalar_lea.vmem %s2, %s600
        %p602 = scmp.lt.s32.totalorder %s30, 1
        %s603 = scalar_select %p602, %s30, 1
        %s604 = smul.addr %s603, 4
        %s605 = smul.addr %s604, 8
        %s606 = scalar_lea.vmem %s3, %s605
        %p607 = scmp.lt.s32.totalorder %s30, 1
        %s608 = scalar_select %p607, %s30, 1
        %s609 = scalar_lea.vmem %s4, %s608
        %p610 = scmp.lt.s32.totalorder %s30, 1
        %s611 = scalar_select %p610, %s30, 1
        %s612 = scalar_lea.vmem %s5, %s611
        %p613 = scmp.lt.s32.totalorder %s30, 1
        %s614 = scalar_select %p613, %s30, 1
        %s615 = scalar_lea.vmem %s6, %s614
        %p616 = scmp.lt.s32.totalorder %s30, 1
        %s617 = scalar_select %p616, %s30, 1
        %s618 = smul.addr %s617, 4
        %s619 = smul.addr %s618, 8
        %s620 = scalar_lea.vmem %s7, %s619
        %p621 = scmp.lt.s32.totalorder %s30, 1
        %s622 = scalar_select %p621, %s30, 1
        %s623 = scalar_lea.vmem %s8, %s622
        %p624 = scmp.lt.s32.totalorder %s30, 1
        %s625 = scalar_select %p624, %s30, 1
        %s626 = smul.addr %s625, 8
        %s627 = smul.addr %s626, 8
        %s628 = scalar_lea.vmem %s9, %s627
        %p629 = scmp.lt.s32.totalorder %s30, 1
        %s630 = scalar_select %p629, %s30, 1
        %s631 = scalar_lea.vmem %s10, %s630
        %p632 = scmp.lt.s32.totalorder %s30, 1
        %s633 = scalar_select %p632, %s30, 1
        %s634 = scalar_lea.vmem %s11, %s633
        %p635 = scmp.lt.s32.totalorder %s30, 1
        %s636 = scalar_select %p635, %s30, 1
        %s637 = scalar_lea.vmem %s12, %s636
        %s638 = smul.u32 2, %s29
        %p639 = scmp.eq.s32.totalorder %s30, 0
        // Predicated region
        $region73: #{transformer_with_maxpool.1} parent=71 // pred_check
          %p640 = pneg %p639
        $region74: #{transformer_with_maxpool.1} parent=71 // pred_check_branch
          %642 = sbr.rel (%p640) target = $region76
        $region75: #{transformer_with_maxpool.1} parent=71 // pred_region
          %v643 = vld [vmem:[%s592] sm:$0xff]
          %v644 = vld [vmem:[%s592 + $0x8] sm:$0xff]
          %vm645 = vcmask 261120
          %646 = vst.msk [vmem:[#allocation2] sm:$0xff] %vm645, %v643
          %647 = vst.msk [vmem:[#allocation2 + $0x8] sm:$0xff] %vm645, %v644
        $region76: #{transformer_with_maxpool.1} parent=71 // pred_fallthru
          _
        %v648 = vld [vmem:[#allocation2] sm:$0xff]
        %v649 = vld [vmem:[#allocation2 + $0x8] sm:$0xff]
        %v650 = vld [vmem:[%s598] sm:$0xff]
        %v651 = vld [vmem:[%s598 + $0x8] sm:$0xff]
        %v652 = vld [vmem:[%s598 + $0x10] sm:$0xff]
        %v653 = vld [vmem:[%s598 + $0x18] sm:$0xff]
        %v654 = vld [vmem:[%s601] sm:$0x1]
        %v656 = vlaneseq
        %v657 = vshrl.u32 %v656, 7
        %v658 = vsub.s32 0, %v657
        %v659 = vrot.slane %v654, %v658
        %vm661 = vcmask 261120
        %v663 = vsel %vm661, %v648, 0
        %v666 = vsel %vm661, %v649, 0
        %668 = vmatprep.subr.mxu0 0.0
        %669 = vmatpush1.msra.mxu0 %v650
        %670 = vmatprep.subr.mxu0 0.0
        %671 = vmatpush1.msra.mxu0 %v651
        %672 = vmatprep.subr.mxu0 0.0
        %673 = vmatpush1.msra.mxu0 %v652
        %674 = vmatprep.subr.mxu0 0.0
        %675 = vmatpush1.msra.mxu0 %v653
        %676 = vmatprep.subr.mxu0 0.0
        %677 = vmatpush1.msra.mxu0 0.0
        %678 = vmatprep.subr.mxu0 0.0
        %679 = vmatpush1.msra.mxu0 0.0
        %680 = vmatprep.subr.mxu0 0.0
        %681 = vmatpush1.msra.mxu0 0.0
        %682 = vmatprep.subr.mxu0 0.0
        %683 = vmatpush1.msra.mxu0 0.0
        %684 = vmatprep.subr.mxu0 0.0
        %685 = vmatpush1.msra.mxu0 0.0
        %686 = vmatprep.subr.mxu0 0.0
        %687 = vmatpush1.msra.mxu0 0.0
        %688 = vmatprep.subr.mxu0 0.0
        %689 = vmatpush1.msra.mxu0 0.0
        %690 = vmatprep.subr.mxu0 0.0
        %691 = vmatpush1.msra.mxu0 0.0
        %692 = vmatprep.subr.mxu0 0.0
        %693 = vmatpush1.msra.mxu0 0.0
        %694 = vmatprep.subr.mxu0 0.0
        %695 = vmatpush1.msra.mxu0 0.0
        %696 = vmatprep.subr.mxu0 0.0
        %697 = vmatpush1.msra.mxu0 0.0
        %698 = vmatprep.subr.mxu0 0.0
        %699 = vmatpush1.msra.mxu0 0.0
        %700 = vmatprep.subr.mxu0 0.0
        %701 = vmatpush1.msra.mxu0 0.0
        %702 = vmatprep.subr.mxu0 0.0
        %703 = vmatpush1.msra.mxu0 0.0
        %704 = vmatprep.subr.mxu0 0.0
        %705 = vmatpush1.msra.mxu0 0.0
        %706 = vmatprep.subr.mxu0 0.0
        %707 = vmatpush1.msra.mxu0 0.0
        %708 = vmatprep.subr.mxu0 0.0
        %709 = vmatpush1.msra.mxu0 0.0
        %710 = vmatprep.subr.mxu0 0.0
        %711 = vmatpush1.msra.mxu0 0.0
        %712 = vmatprep.subr.mxu0 0.0
        %713 = vmatpush1.msra.mxu0 0.0
        %714 = vmatprep.subr.mxu0 0.0
        %715 = vmatpush1.msra.mxu0 0.0
        %716 = vmatprep.subr.mxu0 0.0
        %717 = vmatpush1.msra.mxu0 0.0
        %718 = vmatprep.subr.mxu0 0.0
        %719 = vmatpush1.msra.mxu0 0.0
        %720 = vmatprep.subr.mxu0 0.0
        %721 = vmatpush1.msra.mxu0 0.0
        %722 = vmatprep.subr.mxu0 0.0
        %723 = vmatpush1.msra.mxu0 0.0
        %724 = vmatprep.subr.mxu0 0.0
        %725 = vmatpush1.msra.mxu0 0.0
        %726 = vmatprep.subr.mxu0 0.0
        %727 = vmatpush1.msra.mxu0 0.0
        %728 = vmatprep.subr.mxu0 0.0
        %729 = vmatpush1.msra.mxu0 0.0
        %730 = vmatprep.subr.mxu0 0.0
        %731 = vmatpush1.msra.mxu0 0.0
        %732 = vmatprep.mubr.f32.mxu0 0.0
        %733 = vmatmul.mubr.f32.gmra.mrb[0].mxu0 %v663
        %v734 = vpop.f32.mrb[0].mxu0
        %v735 = vadd.f32 %v659, %v734
        %v736 = vpop.f32.mrb[0].mxu0
        %737 = vmatprep.mubr.f32.mxu0 0.0
        %738 = vmatmul.mubr.f32.gmra.mrb[0].mxu0 %v666
        %v739 = vpop.f32.mrb[0].mxu0
        %v740 = vadd.f32 %v659, %v739
        %v741 = vpop.f32.mrb[0].mxu0
        %742 = vdwg.mxu0
        %744 = vrot.lane.b32.xlu0 %v735, 96
        %v745 = vpop.permute.xlu0 %744
        %vm746 = vcmask 64512
        %v747 = vsel %vm746, %v735, 0
        %v749 = vsel %vm746, %v745, 0
        %751 = vmatprep.subr.mxu0 0.0
        %752 = vmatpush1.xpose.msra.mxu0 %v749
        %753 = vmatprep.subr.mxu0 0.0
        %754 = vmatpush1.xpose.msra.mxu0 0.0
        %755 = vmatprep.subr.mxu0 0.0
        %756 = vmatpush1.xpose.msra.mxu0 0.0
        %757 = vmatprep.subr.mxu0 0.0
        %758 = vmatpush1.xpose.msra.mxu0 0.0
        %759 = vmatprep.subr.mxu0 0.0
        %760 = vmatpush1.xpose.msra.mxu0 0.0
        %761 = vmatprep.subr.mxu0 0.0
        %762 = vmatpush1.xpose.msra.mxu0 0.0
        %763 = vmatprep.subr.mxu0 0.0
        %764 = vmatpush1.xpose.msra.mxu0 0.0
        %765 = vmatprep.subr.mxu0 0.0
        %766 = vmatpush1.xpose.msra.mxu0 0.0
        %767 = vmatprep.subr.mxu0 0.0
        %768 = vmatpush1.xpose.msra.mxu0 0.0
        %769 = vmatprep.subr.mxu0 0.0
        %770 = vmatpush1.xpose.msra.mxu0 0.0
        %771 = vmatprep.subr.mxu0 0.0
        %772 = vmatpush1.xpose.msra.mxu0 0.0
        %773 = vmatprep.subr.mxu0 0.0
        %774 = vmatpush1.xpose.msra.mxu0 0.0
        %775 = vmatprep.subr.mxu0 0.0
        %776 = vmatpush1.xpose.msra.mxu0 0.0
        %777 = vmatprep.subr.mxu0 0.0
        %778 = vmatpush1.xpose.msra.mxu0 0.0
        %779 = vmatprep.subr.mxu0 0.0
        %780 = vmatpush1.xpose.msra.mxu0 0.0
        %781 = vmatprep.subr.mxu0 0.0
        %782 = vmatpush1.xpose.msra.mxu0 0.0
        %783 = vmatprep.subr.mxu0 0.0
        %784 = vmatpush1.xpose.msra.mxu0 0.0
        %785 = vmatprep.subr.mxu0 0.0
        %786 = vmatpush1.xpose.msra.mxu0 0.0
        %787 = vmatprep.subr.mxu0 0.0
        %788 = vmatpush1.xpose.msra.mxu0 0.0
        %789 = vmatprep.subr.mxu0 0.0
        %790 = vmatpush1.xpose.msra.mxu0 0.0
        %791 = vmatprep.subr.mxu0 0.0
        %792 = vmatpush1.xpose.msra.mxu0 0.0
        %793 = vmatprep.subr.mxu0 0.0
        %794 = vmatpush1.xpose.msra.mxu0 0.0
        %795 = vmatprep.subr.mxu0 0.0
        %796 = vmatpush1.xpose.msra.mxu0 0.0
        %797 = vmatprep.subr.mxu0 0.0
        %798 = vmatpush1.xpose.msra.mxu0 0.0
        %799 = vmatprep.subr.mxu0 0.0
        %800 = vmatpush1.xpose.msra.mxu0 0.0
        %801 = vmatprep.subr.mxu0 0.0
        %802 = vmatpush1.xpose.msra.mxu0 0.0
        %803 = vmatprep.subr.mxu0 0.0
        %804 = vmatpush1.xpose.msra.mxu0 0.0
        %805 = vmatprep.subr.mxu0 0.0
        %806 = vmatpush1.xpose.msra.mxu0 0.0
        %807 = vmatprep.subr.mxu0 0.0
        %808 = vmatpush1.xpose.msra.mxu0 0.0
        %809 = vmatprep.subr.mxu0 0.0
        %810 = vmatpush1.xpose.msra.mxu0 0.0
        %811 = vmatprep.subr.mxu0 0.0
        %812 = vmatpush1.xpose.msra.mxu0 0.0
        %813 = vmatprep.subr.mxu0 0.0
        %814 = vmatpush1.xpose.msra.mxu0 0.0
        %815 = vmatprep.mubr.f32.mxu0 0.0
        %816 = vmatmul.mubr.f32.gmra.mrb[0].mxu0 %v747
        %v817 = vpop.f32.mrb[0].mxu0
        %v818 = vadd.f32 0.0, %v817
        %v819 = vpop.f32.mrb[0].mxu0
        %820 = vdwg.mxu0
        %822 = vrot.lane.b32.xlu0 %v740, 96
        %v823 = vpop.permute.xlu0 %822
        %v824 = vsel %vm746, %v740, 0
        %v826 = vsel %vm746, %v823, 0
        %828 = vmatprep.subr.mxu0 0.0
        %829 = vmatpush1.xpose.msra.mxu0 %v826
        %830 = vmatprep.subr.mxu0 0.0
        %831 = vmatpush1.xpose.msra.mxu0 0.0
        %832 = vmatprep.subr.mxu0 0.0
        %833 = vmatpush1.xpose.msra.mxu0 0.0
        %834 = vmatprep.subr.mxu0 0.0
        %835 = vmatpush1.xpose.msra.mxu0 0.0
        %836 = vmatprep.subr.mxu0 0.0
        %837 = vmatpush1.xpose.msra.mxu0 0.0
        %838 = vmatprep.subr.mxu0 0.0
        %839 = vmatpush1.xpose.msra.mxu0 0.0
        %840 = vmatprep.subr.mxu0 0.0
        %841 = vmatpush1.xpose.msra.mxu0 0.0
        %842 = vmatprep.subr.mxu0 0.0
        %843 = vmatpush1.xpose.msra.mxu0 0.0
        %844 = vmatprep.subr.mxu0 0.0
        %845 = vmatpush1.xpose.msra.mxu0 0.0
        %846 = vmatprep.subr.mxu0 0.0
        %847 = vmatpush1.xpose.msra.mxu0 0.0
        %848 = vmatprep.subr.mxu0 0.0
        %849 = vmatpush1.xpose.msra.mxu0 0.0
        %850 = vmatprep.subr.mxu0 0.0
        %851 = vmatpush1.xpose.msra.mxu0 0.0
        %852 = vmatprep.subr.mxu0 0.0
        %853 = vmatpush1.xpose.msra.mxu0 0.0
        %854 = vmatprep.subr.mxu0 0.0
        %855 = vmatpush1.xpose.msra.mxu0 0.0
        %856 = vmatprep.subr.mxu0 0.0
        %857 = vmatpush1.xpose.msra.mxu0 0.0
        %858 = vmatprep.subr.mxu0 0.0
        %859 = vmatpush1.xpose.msra.mxu0 0.0
        %860 = vmatprep.subr.mxu0 0.0
        %861 = vmatpush1.xpose.msra.mxu0 0.0
        %862 = vmatprep.subr.mxu0 0.0
        %863 = vmatpush1.xpose.msra.mxu0 0.0
        %864 = vmatprep.subr.mxu0 0.0
        %865 = vmatpush1.xpose.msra.mxu0 0.0
        %866 = vmatprep.subr.mxu0 0.0
        %867 = vmatpush1.xpose.msra.mxu0 0.0
        %868 = vmatprep.subr.mxu0 0.0
        %869 = vmatpush1.xpose.msra.mxu0 0.0
        %870 = vmatprep.subr.mxu0 0.0
        %871 = vmatpush1.xpose.msra.mxu0 0.0
        %872 = vmatprep.subr.mxu0 0.0
        %873 = vmatpush1.xpose.msra.mxu0 0.0
        %874 = vmatprep.subr.mxu0 0.0
        %875 = vmatpush1.xpose.msra.mxu0 0.0
        %876 = vmatprep.subr.mxu0 0.0
        %877 = vmatpush1.xpose.msra.mxu0 0.0
        %878 = vmatprep.subr.mxu0 0.0
        %879 = vmatpush1.xpose.msra.mxu0 0.0
        %880 = vmatprep.subr.mxu0 0.0
        %881 = vmatpush1.xpose.msra.mxu0 0.0
        %882 = vmatprep.subr.mxu0 0.0
        %883 = vmatpush1.xpose.msra.mxu0 0.0
        %884 = vmatprep.subr.mxu0 0.0
        %885 = vmatpush1.xpose.msra.mxu0 0.0
        %886 = vmatprep.subr.mxu0 0.0
        %887 = vmatpush1.xpose.msra.mxu0 0.0
        %888 = vmatprep.subr.mxu0 0.0
        %889 = vmatpush1.xpose.msra.mxu0 0.0
        %890 = vmatprep.subr.mxu0 0.0
        %891 = vmatpush1.xpose.msra.mxu0 0.0
        %892 = vmatprep.mubr.f32.mxu0 0.0
        %893 = vmatmul.mubr.f32.gmra.mrb[0].mxu0 %v824
        %v894 = vpop.f32.mrb[0].mxu0
        %v895 = vadd.f32 0.0, %v894
        %v896 = vpop.f32.mrb[0].mxu0
        %897 = vdwg.mxu0
        %v898 = vsel %vm746, %v818, -inf
        %899 = vmax.xlane.f32.xlu0 %v898
        %v900 = vpop.xlane.xlu0 %899
        %v901 = vsel %vm746, %v895, -inf
        %902 = vmax.xlane.f32.xlu0 %v901
        %v903 = vpop.xlane.xlu0 %902
        %v904 = vsub.f32 %v818, %v900
        %v905 = vsub.f32 %v895, %v903
        %v906 = vmul.f32 %v904, 1.442695
        %v907 = vpow.pop %v906
        %v908 = vmul.f32 %v905, 1.442695
        %v909 = vpow.pop %v908
        %v910 = vsel %vm746, %v907, 0.0
        %911 = vadd.xlane.f32.xlu0 %v910
        %v912 = vpop.xlane.xlu0 %911
        %v913 = vsel %vm746, %v909, 0.0
        %914 = vadd.xlane.f32.xlu0 %v913
        %v915 = vpop.xlane.xlu0 %914
        %v916 = vrcp.pop %v912
        %v917 = vrcp.pop %v915
        %v918 = vmul.f32 %v907, %v916
        %v919 = vmul.f32 %v909, %v917
        %920 = vrot.lane.b32.xlu0 %v735, 64
        %v921 = vpop.permute.xlu0 %920
        %v924 = vsel %vm746, %v918, 0
        %926 = vmatprep.subr.mxu0 0.0
        %927 = vmatpush1.msra.mxu0 %v921
        %928 = vmatprep.subr.mxu0 0.0
        %929 = vmatpush1.msra.mxu0 0.0
        %930 = vmatprep.subr.mxu0 0.0
        %931 = vmatpush1.msra.mxu0 0.0
        %932 = vmatprep.subr.mxu0 0.0
        %933 = vmatpush1.msra.mxu0 0.0
        %934 = vmatprep.subr.mxu0 0.0
        %935 = vmatpush1.msra.mxu0 0.0
        %936 = vmatprep.subr.mxu0 0.0
        %937 = vmatpush1.msra.mxu0 0.0
        %938 = vmatprep.subr.mxu0 0.0
        %939 = vmatpush1.msra.mxu0 0.0
        %940 = vmatprep.subr.mxu0 0.0
        %941 = vmatpush1.msra.mxu0 0.0
        %942 = vmatprep.subr.mxu0 0.0
        %943 = vmatpush1.msra.mxu0 0.0
        %944 = vmatprep.subr.mxu0 0.0
        %945 = vmatpush1.msra.mxu0 0.0
        %946 = vmatprep.subr.mxu0 0.0
        %947 = vmatpush1.msra.mxu0 0.0
        %948 = vmatprep.subr.mxu0 0.0
        %949 = vmatpush1.msra.mxu0 0.0
        %950 = vmatprep.subr.mxu0 0.0
        %951 = vmatpush1.msra.mxu0 0.0
        %952 = vmatprep.subr.mxu0 0.0
        %953 = vmatpush1.msra.mxu0 0.0
        %954 = vmatprep.subr.mxu0 0.0
        %955 = vmatpush1.msra.mxu0 0.0
        %956 = vmatprep.subr.mxu0 0.0
        %957 = vmatpush1.msra.mxu0 0.0
        %958 = vmatprep.subr.mxu0 0.0
        %959 = vmatpush1.msra.mxu0 0.0
        %960 = vmatprep.subr.mxu0 0.0
        %961 = vmatpush1.msra.mxu0 0.0
        %962 = vmatprep.subr.mxu0 0.0
        %963 = vmatpush1.msra.mxu0 0.0
        %964 = vmatprep.subr.mxu0 0.0
        %965 = vmatpush1.msra.mxu0 0.0
        %966 = vmatprep.subr.mxu0 0.0
        %967 = vmatpush1.msra.mxu0 0.0
        %968 = vmatprep.subr.mxu0 0.0
        %969 = vmatpush1.msra.mxu0 0.0
        %970 = vmatprep.subr.mxu0 0.0
        %971 = vmatpush1.msra.mxu0 0.0
        %972 = vmatprep.subr.mxu0 0.0
        %973 = vmatpush1.msra.mxu0 0.0
        %974 = vmatprep.subr.mxu0 0.0
        %975 = vmatpush1.msra.mxu0 0.0
        %976 = vmatprep.subr.mxu0 0.0
        %977 = vmatpush1.msra.mxu0 0.0
        %978 = vmatprep.subr.mxu0 0.0
        %979 = vmatpush1.msra.mxu0 0.0
        %980 = vmatprep.subr.mxu0 0.0
        %981 = vmatpush1.msra.mxu0 0.0
        %982 = vmatprep.subr.mxu0 0.0
        %983 = vmatpush1.msra.mxu0 0.0
        %984 = vmatprep.subr.mxu0 0.0
        %985 = vmatpush1.msra.mxu0 0.0
        %986 = vmatprep.subr.mxu0 0.0
        %987 = vmatpush1.msra.mxu0 0.0
        %988 = vmatprep.subr.mxu0 0.0
        %989 = vmatpush1.msra.mxu0 0.0
        %990 = vmatprep.mubr.f32.mxu0 0.0
        %991 = vmatmul.mubr.f32.gmra.mrb[0].mxu0 %v924
        %v992 = vpop.f32.mrb[0].mxu0
        %v993 = vadd.f32 0.0, %v992
        %v994 = vpop.f32.mrb[0].mxu0
        %995 = vdwg.mxu0
        %996 = vrot.lane.b32.xlu0 %v740, 64
        %v997 = vpop.permute.xlu0 %996
        %v1000 = vsel %vm746, %v919, 0
        %1002 = vmatprep.subr.mxu0 0.0
        %1003 = vmatpush1.msra.mxu0 %v997
        %1004 = vmatprep.subr.mxu0 0.0
        %1005 = vmatpush1.msra.mxu0 0.0
        %1006 = vmatprep.subr.mxu0 0.0
        %1007 = vmatpush1.msra.mxu0 0.0
        %1008 = vmatprep.subr.mxu0 0.0
        %1009 = vmatpush1.msra.mxu0 0.0
        %1010 = vmatprep.subr.mxu0 0.0
        %1011 = vmatpush1.msra.mxu0 0.0
        %1012 = vmatprep.subr.mxu0 0.0
        %1013 = vmatpush1.msra.mxu0 0.0
        %1014 = vmatprep.subr.mxu0 0.0
        %1015 = vmatpush1.msra.mxu0 0.0
        %1016 = vmatprep.subr.mxu0 0.0
        %1017 = vmatpush1.msra.mxu0 0.0
        %1018 = vmatprep.subr.mxu0 0.0
        %1019 = vmatpush1.msra.mxu0 0.0
        %1020 = vmatprep.subr.mxu0 0.0
        %1021 = vmatpush1.msra.mxu0 0.0
        %1022 = vmatprep.subr.mxu0 0.0
        %1023 = vmatpush1.msra.mxu0 0.0
        %1024 = vmatprep.subr.mxu0 0.0
        %1025 = vmatpush1.msra.mxu0 0.0
        %1026 = vmatprep.subr.mxu0 0.0
        %1027 = vmatpush1.msra.mxu0 0.0
        %1028 = vmatprep.subr.mxu0 0.0
        %1029 = vmatpush1.msra.mxu0 0.0
        %1030 = vmatprep.subr.mxu0 0.0
        %1031 = vmatpush1.msra.mxu0 0.0
        %1032 = vmatprep.subr.mxu0 0.0
        %1033 = vmatpush1.msra.mxu0 0.0
        %1034 = vmatprep.subr.mxu0 0.0
        %1035 = vmatpush1.msra.mxu0 0.0
        %1036 = vmatprep.subr.mxu0 0.0
        %1037 = vmatpush1.msra.mxu0 0.0
        %1038 = vmatprep.subr.mxu0 0.0
        %1039 = vmatpush1.msra.mxu0 0.0
        %1040 = vmatprep.subr.mxu0 0.0
        %1041 = vmatpush1.msra.mxu0 0.0
        %1042 = vmatprep.subr.mxu0 0.0
        %1043 = vmatpush1.msra.mxu0 0.0
        %1044 = vmatprep.subr.mxu0 0.0
        %1045 = vmatpush1.msra.mxu0 0.0
        %1046 = vmatprep.subr.mxu0 0.0
        %1047 = vmatpush1.msra.mxu0 0.0
        %1048 = vmatprep.subr.mxu0 0.0
        %1049 = vmatpush1.msra.mxu0 0.0
        %1050 = vmatprep.subr.mxu0 0.0
        %1051 = vmatpush1.msra.mxu0 0.0
        %1052 = vmatprep.subr.mxu0 0.0
        %1053 = vmatpush1.msra.mxu0 0.0
        %1054 = vmatprep.subr.mxu0 0.0
        %1055 = vmatpush1.msra.mxu0 0.0
        %1056 = vmatprep.subr.mxu0 0.0
        %1057 = vmatpush1.msra.mxu0 0.0
        %1058 = vmatprep.subr.mxu0 0.0
        %1059 = vmatpush1.msra.mxu0 0.0
        %1060 = vmatprep.subr.mxu0 0.0
        %1061 = vmatpush1.msra.mxu0 0.0
        %1062 = vmatprep.subr.mxu0 0.0
        %1063 = vmatpush1.msra.mxu0 0.0
        %1064 = vmatprep.subr.mxu0 0.0
        %1065 = vmatpush1.msra.mxu0 0.0
        %1066 = vmatprep.mubr.f32.mxu0 0.0
        %1067 = vmatmul.mubr.f32.gmra.mrb[0].mxu0 %v1000
        %v1068 = vpop.f32.mrb[0].mxu0
        %v1069 = vadd.f32 0.0, %v1068
        %v1070 = vpop.f32.mrb[0].mxu0
        %1071 = vdwg.mxu0
        %1072 = vrot.lane.b32.xlu0 %v735, 120
        %v1073 = vpop.permute.xlu0 %1072
        %1074 = vrot.lane.b32.xlu0 %v735, 88
        %v1075 = vpop.permute.xlu0 %1074
        %v1076 = vsel %vm746, %v1073, 0
        %v1078 = vsel %vm746, %v1075, 0
        %1080 = vmatprep.subr.mxu0 0.0
        %1081 = vmatpush1.xpose.msra.mxu0 %v1078
        %1082 = vmatprep.subr.mxu0 0.0
        %1083 = vmatpush1.xpose.msra.mxu0 0.0
        %1084 = vmatprep.subr.mxu0 0.0
        %1085 = vmatpush1.xpose.msra.mxu0 0.0
        %1086 = vmatprep.subr.mxu0 0.0
        %1087 = vmatpush1.xpose.msra.mxu0 0.0
        %1088 = vmatprep.subr.mxu0 0.0
        %1089 = vmatpush1.xpose.msra.mxu0 0.0
        %1090 = vmatprep.subr.mxu0 0.0
        %1091 = vmatpush1.xpose.msra.mxu0 0.0
        %1092 = vmatprep.subr.mxu0 0.0
        %1093 = vmatpush1.xpose.msra.mxu0 0.0
        %1094 = vmatprep.subr.mxu0 0.0
        %1095 = vmatpush1.xpose.msra.mxu0 0.0
        %1096 = vmatprep.subr.mxu0 0.0
        %1097 = vmatpush1.xpose.msra.mxu0 0.0
        %1098 = vmatprep.subr.mxu0 0.0
        %1099 = vmatpush1.xpose.msra.mxu0 0.0
        %1100 = vmatprep.subr.mxu0 0.0
        %1101 = vmatpush1.xpose.msra.mxu0 0.0
        %1102 = vmatprep.subr.mxu0 0.0
        %1103 = vmatpush1.xpose.msra.mxu0 0.0
        %1104 = vmatprep.subr.mxu0 0.0
        %1105 = vmatpush1.xpose.msra.mxu0 0.0
        %1106 = vmatprep.subr.mxu0 0.0
        %1107 = vmatpush1.xpose.msra.mxu0 0.0
        %1108 = vmatprep.subr.mxu0 0.0
        %1109 = vmatpush1.xpose.msra.mxu0 0.0
        %1110 = vmatprep.subr.mxu0 0.0
        %1111 = vmatpush1.xpose.msra.mxu0 0.0
        %1112 = vmatprep.subr.mxu0 0.0
        %1113 = vmatpush1.xpose.msra.mxu0 0.0
        %1114 = vmatprep.subr.mxu0 0.0
        %1115 = vmatpush1.xpose.msra.mxu0 0.0
        %1116 = vmatprep.subr.mxu0 0.0
        %1117 = vmatpush1.xpose.msra.mxu0 0.0
        %1118 = vmatprep.subr.mxu0 0.0
        %1119 = vmatpush1.xpose.msra.mxu0 0.0
        %1120 = vmatprep.subr.mxu0 0.0
        %1121 = vmatpush1.xpose.msra.mxu0 0.0
        %1122 = vmatprep.subr.mxu0 0.0
        %1123 = vmatpush1.xpose.msra.mxu0 0.0
        %1124 = vmatprep.subr.mxu0 0.0
        %1125 = vmatpush1.xpose.msra.mxu0 0.0
        %1126 = vmatprep.subr.mxu0 0.0
        %1127 = vmatpush1.xpose.msra.mxu0 0.0
        %1128 = vmatprep.subr.mxu0 0.0
        %1129 = vmatpush1.xpose.msra.mxu0 0.0
        %1130 = vmatprep.subr.mxu0 0.0
        %1131 = vmatpush1.xpose.msra.mxu0 0.0
        %1132 = vmatprep.subr.mxu0 0.0
        %1133 = vmatpush1.xpose.msra.mxu0 0.0
        %1134 = vmatprep.subr.mxu0 0.0
        %1135 = vmatpush1.xpose.msra.mxu0 0.0
        %1136 = vmatprep.subr.mxu0 0.0
        %1137 = vmatpush1.xpose.msra.mxu0 0.0
        %1138 = vmatprep.subr.mxu0 0.0
        %1139 = vmatpush1.xpose.msra.mxu0 0.0
        %1140 = vmatprep.subr.mxu0 0.0
        %1141 = vmatpush1.xpose.msra.mxu0 0.0
        %1142 = vmatprep.subr.mxu0 0.0
        %1143 = vmatpush1.xpose.msra.mxu0 0.0
        %1144 = vmatprep.mubr.f32.mxu0 0.0
        %1145 = vmatmul.mubr.f32.gmra.mrb[0].mxu0 %v1076
        %v1146 = vpop.f32.mrb[0].mxu0
        %v1147 = vadd.f32 0.0, %v1146
        %v1148 = vpop.f32.mrb[0].mxu0
        %1149 = vdwg.mxu0
        %1150 = vrot.lane.b32.xlu0 %v740, 120
        %v1151 = vpop.permute.xlu0 %1150
        %1152 = vrot.lane.b32.xlu0 %v740, 88
        %v1153 = vpop.permute.xlu0 %1152
        %v1154 = vsel %vm746, %v1151, 0
        %v1156 = vsel %vm746, %v1153, 0
        %1158 = vmatprep.subr.mxu0 0.0
        %1159 = vmatpush1.xpose.msra.mxu0 %v1156
        %1160 = vmatprep.subr.mxu0 0.0
        %1161 = vmatpush1.xpose.msra.mxu0 0.0
        %1162 = vmatprep.subr.mxu0 0.0
        %1163 = vmatpush1.xpose.msra.mxu0 0.0
        %1164 = vmatprep.subr.mxu0 0.0
        %1165 = vmatpush1.xpose.msra.mxu0 0.0
        %1166 = vmatprep.subr.mxu0 0.0
        %1167 = vmatpush1.xpose.msra.mxu0 0.0
        %1168 = vmatprep.subr.mxu0 0.0
        %1169 = vmatpush1.xpose.msra.mxu0 0.0
        %1170 = vmatprep.subr.mxu0 0.0
        %1171 = vmatpush1.xpose.msra.mxu0 0.0
        %1172 = vmatprep.subr.mxu0 0.0
        %1173 = vmatpush1.xpose.msra.mxu0 0.0
        %1174 = vmatprep.subr.mxu0 0.0
        %1175 = vmatpush1.xpose.msra.mxu0 0.0
        %1176 = vmatprep.subr.mxu0 0.0
        %1177 = vmatpush1.xpose.msra.mxu0 0.0
        %1178 = vmatprep.subr.mxu0 0.0
        %1179 = vmatpush1.xpose.msra.mxu0 0.0
        %1180 = vmatprep.subr.mxu0 0.0
        %1181 = vmatpush1.xpose.msra.mxu0 0.0
        %1182 = vmatprep.subr.mxu0 0.0
        %1183 = vmatpush1.xpose.msra.mxu0 0.0
        %1184 = vmatprep.subr.mxu0 0.0
        %1185 = vmatpush1.xpose.msra.mxu0 0.0
        %1186 = vmatprep.subr.mxu0 0.0
        %1187 = vmatpush1.xpose.msra.mxu0 0.0
        %1188 = vmatprep.subr.mxu0 0.0
        %1189 = vmatpush1.xpose.msra.mxu0 0.0
        %1190 = vmatprep.subr.mxu0 0.0
        %1191 = vmatpush1.xpose.msra.mxu0 0.0
        %1192 = vmatprep.subr.mxu0 0.0
        %1193 = vmatpush1.xpose.msra.mxu0 0.0
        %1194 = vmatprep.subr.mxu0 0.0
        %1195 = vmatpush1.xpose.msra.mxu0 0.0
        %1196 = vmatprep.subr.mxu0 0.0
        %1197 = vmatpush1.xpose.msra.mxu0 0.0
        %1198 = vmatprep.subr.mxu0 0.0
        %1199 = vmatpush1.xpose.msra.mxu0 0.0
        %1200 = vmatprep.subr.mxu0 0.0
        %1201 = vmatpush1.xpose.msra.mxu0 0.0
        %1202 = vmatprep.subr.mxu0 0.0
        %1203 = vmatpush1.xpose.msra.mxu0 0.0
        %1204 = vmatprep.subr.mxu0 0.0
        %1205 = vmatpush1.xpose.msra.mxu0 0.0
        %1206 = vmatprep.subr.mxu0 0.0
        %1207 = vmatpush1.xpose.msra.mxu0 0.0
        %1208 = vmatprep.subr.mxu0 0.0
        %1209 = vmatpush1.xpose.msra.mxu0 0.0
        %1210 = vmatprep.subr.mxu0 0.0
        %1211 = vmatpush1.xpose.msra.mxu0 0.0
        %1212 = vmatprep.subr.mxu0 0.0
        %1213 = vmatpush1.xpose.msra.mxu0 0.0
        %1214 = vmatprep.subr.mxu0 0.0
        %1215 = vmatpush1.xpose.msra.mxu0 0.0
        %1216 = vmatprep.subr.mxu0 0.0
        %1217 = vmatpush1.xpose.msra.mxu0 0.0
        %1218 = vmatprep.subr.mxu0 0.0
        %1219 = vmatpush1.xpose.msra.mxu0 0.0
        %1220 = vmatprep.subr.mxu0 0.0
        %1221 = vmatpush1.xpose.msra.mxu0 0.0
        %1222 = vmatprep.mubr.f32.mxu0 0.0
        %1223 = vmatmul.mubr.f32.gmra.mrb[0].mxu0 %v1154
        %v1224 = vpop.f32.mrb[0].mxu0
        %v1225 = vadd.f32 0.0, %v1224
        %v1226 = vpop.f32.mrb[0].mxu0
        %1227 = vdwg.mxu0
        %v1228 = vsel %vm746, %v1147, -inf
        %1229 = vmax.xlane.f32.xlu0 %v1228
        %v1230 = vpop.xlane.xlu0 %1229
        %v1231 = vsel %vm746, %v1225, -inf
        %1232 = vmax.xlane.f32.xlu0 %v1231
        %v1233 = vpop.xlane.xlu0 %1232
        %v1234 = vsub.f32 %v1147, %v1230
        %v1235 = vsub.f32 %v1225, %v1233
        %v1236 = vmul.f32 %v1234, 1.442695
        %v1237 = vpow.pop %v1236
        %v1238 = vmul.f32 %v1235, 1.442695
        %v1239 = vpow.pop %v1238
        %v1240 = vsel %vm746, %v1237, 0.0
        %1241 = vadd.xlane.f32.xlu0 %v1240
        %v1242 = vpop.xlane.xlu0 %1241
        %v1243 = vsel %vm746, %v1239, 0.0
        %1244 = vadd.xlane.f32.xlu0 %v1243
        %v1245 = vpop.xlane.xlu0 %1244
        %v1246 = vrcp.pop %v1242
        %v1247 = vrcp.pop %v1245
        %v1248 = vmul.f32 %v1237, %v1246
        %v1249 = vmul.f32 %v1239, %v1247
        %1250 = vrot.lane.b32.xlu0 %v735, 56
        %v1251 = vpop.permute.xlu0 %1250
        %v1254 = vsel %vm746, %v1248, 0
        %1256 = vmatprep.subr.mxu0 0.0
        %1257 = vmatpush1.msra.mxu0 %v1251
        %1258 = vmatprep.subr.mxu0 0.0
        %1259 = vmatpush1.msra.mxu0 0.0
        %1260 = vmatprep.subr.mxu0 0.0
        %1261 = vmatpush1.msra.mxu0 0.0
        %1262 = vmatprep.subr.mxu0 0.0
        %1263 = vmatpush1.msra.mxu0 0.0
        %1264 = vmatprep.subr.mxu0 0.0
        %1265 = vmatpush1.msra.mxu0 0.0
        %1266 = vmatprep.subr.mxu0 0.0
        %1267 = vmatpush1.msra.mxu0 0.0
        %1268 = vmatprep.subr.mxu0 0.0
        %1269 = vmatpush1.msra.mxu0 0.0
        %1270 = vmatprep.subr.mxu0 0.0
        %1271 = vmatpush1.msra.mxu0 0.0
        %1272 = vmatprep.subr.mxu0 0.0
        %1273 = vmatpush1.msra.mxu0 0.0
        %1274 = vmatprep.subr.mxu0 0.0
        %1275 = vmatpush1.msra.mxu0 0.0
        %1276 = vmatprep.subr.mxu0 0.0
        %1277 = vmatpush1.msra.mxu0 0.0
        %1278 = vmatprep.subr.mxu0 0.0
        %1279 = vmatpush1.msra.mxu0 0.0
        %1280 = vmatprep.subr.mxu0 0.0
        %1281 = vmatpush1.msra.mxu0 0.0
        %1282 = vmatprep.subr.mxu0 0.0
        %1283 = vmatpush1.msra.mxu0 0.0
        %1284 = vmatprep.subr.mxu0 0.0
        %1285 = vmatpush1.msra.mxu0 0.0
        %1286 = vmatprep.subr.mxu0 0.0
        %1287 = vmatpush1.msra.mxu0 0.0
        %1288 = vmatprep.subr.mxu0 0.0
        %1289 = vmatpush1.msra.mxu0 0.0
        %1290 = vmatprep.subr.mxu0 0.0
        %1291 = vmatpush1.msra.mxu0 0.0
        %1292 = vmatprep.subr.mxu0 0.0
        %1293 = vmatpush1.msra.mxu0 0.0
        %1294 = vmatprep.subr.mxu0 0.0
        %1295 = vmatpush1.msra.mxu0 0.0
        %1296 = vmatprep.subr.mxu0 0.0
        %1297 = vmatpush1.msra.mxu0 0.0
        %1298 = vmatprep.subr.mxu0 0.0
        %1299 = vmatpush1.msra.mxu0 0.0
        %1300 = vmatprep.subr.mxu0 0.0
        %1301 = vmatpush1.msra.mxu0 0.0
        %1302 = vmatprep.subr.mxu0 0.0
        %1303 = vmatpush1.msra.mxu0 0.0
        %1304 = vmatprep.subr.mxu0 0.0
        %1305 = vmatpush1.msra.mxu0 0.0
        %1306 = vmatprep.subr.mxu0 0.0
        %1307 = vmatpush1.msra.mxu0 0.0
        %1308 = vmatprep.subr.mxu0 0.0
        %1309 = vmatpush1.msra.mxu0 0.0
        %1310 = vmatprep.subr.mxu0 0.0
        %1311 = vmatpush1.msra.mxu0 0.0
        %1312 = vmatprep.subr.mxu0 0.0
        %1313 = vmatpush1.msra.mxu0 0.0
        %1314 = vmatprep.subr.mxu0 0.0
        %1315 = vmatpush1.msra.mxu0 0.0
        %1316 = vmatprep.subr.mxu0 0.0
        %1317 = vmatpush1.msra.mxu0 0.0
        %1318 = vmatprep.subr.mxu0 0.0
        %1319 = vmatpush1.msra.mxu0 0.0
        %1320 = vmatprep.mubr.f32.mxu0 0.0
        %1321 = vmatmul.mubr.f32.gmra.mrb[0].mxu0 %v1254
        %v1322 = vpop.f32.mrb[0].mxu0
        %v1323 = vadd.f32 0.0, %v1322
        %v1324 = vpop.f32.mrb[0].mxu0
        %1325 = vdwg.mxu0
        %1326 = vrot.lane.b32.xlu0 %v740, 56
        %v1327 = vpop.permute.xlu0 %1326
        %v1330 = vsel %vm746, %v1249, 0
        %1332 = vmatprep.subr.mxu0 0.0
        %1333 = vmatpush1.msra.mxu0 %v1327
        %1334 = vmatprep.subr.mxu0 0.0
        %1335 = vmatpush1.msra.mxu0 0.0
        %1336 = vmatprep.subr.mxu0 0.0
        %1337 = vmatpush1.msra.mxu0 0.0
        %1338 = vmatprep.subr.mxu0 0.0
        %1339 = vmatpush1.msra.mxu0 0.0
        %1340 = vmatprep.subr.mxu0 0.0
        %1341 = vmatpush1.msra.mxu0 0.0
        %1342 = vmatprep.subr.mxu0 0.0
        %1343 = vmatpush1.msra.mxu0 0.0
        %1344 = vmatprep.subr.mxu0 0.0
        %1345 = vmatpush1.msra.mxu0 0.0
        %1346 = vmatprep.subr.mxu0 0.0
        %1347 = vmatpush1.msra.mxu0 0.0
        %1348 = vmatprep.subr.mxu0 0.0
        %1349 = vmatpush1.msra.mxu0 0.0
        %1350 = vmatprep.subr.mxu0 0.0
        %1351 = vmatpush1.msra.mxu0 0.0
        %1352 = vmatprep.subr.mxu0 0.0
        %1353 = vmatpush1.msra.mxu0 0.0
        %1354 = vmatprep.subr.mxu0 0.0
        %1355 = vmatpush1.msra.mxu0 0.0
        %1356 = vmatprep.subr.mxu0 0.0
        %1357 = vmatpush1.msra.mxu0 0.0
        %1358 = vmatprep.subr.mxu0 0.0
        %1359 = vmatpush1.msra.mxu0 0.0
        %1360 = vmatprep.subr.mxu0 0.0
        %1361 = vmatpush1.msra.mxu0 0.0
        %1362 = vmatprep.subr.mxu0 0.0
        %1363 = vmatpush1.msra.mxu0 0.0
        %1364 = vmatprep.subr.mxu0 0.0
        %1365 = vmatpush1.msra.mxu0 0.0
        %1366 = vmatprep.subr.mxu0 0.0
        %1367 = vmatpush1.msra.mxu0 0.0
        %1368 = vmatprep.subr.mxu0 0.0
        %1369 = vmatpush1.msra.mxu0 0.0
        %1370 = vmatprep.subr.mxu0 0.0
        %1371 = vmatpush1.msra.mxu0 0.0
        %1372 = vmatprep.subr.mxu0 0.0
        %1373 = vmatpush1.msra.mxu0 0.0
        %1374 = vmatprep.subr.mxu0 0.0
        %1375 = vmatpush1.msra.mxu0 0.0
        %1376 = vmatprep.subr.mxu0 0.0
        %1377 = vmatpush1.msra.mxu0 0.0
        %1378 = vmatprep.subr.mxu0 0.0
        %1379 = vmatpush1.msra.mxu0 0.0
        %1380 = vmatprep.subr.mxu0 0.0
        %1381 = vmatpush1.msra.mxu0 0.0
        %1382 = vmatprep.subr.mxu0 0.0
        %1383 = vmatpush1.msra.mxu0 0.0
        %1384 = vmatprep.subr.mxu0 0.0
        %1385 = vmatpush1.msra.mxu0 0.0
        %1386 = vmatprep.subr.mxu0 0.0
        %1387 = vmatpush1.msra.mxu0 0.0
        %1388 = vmatprep.subr.mxu0 0.0
        %1389 = vmatpush1.msra.mxu0 0.0
        %1390 = vmatprep.subr.mxu0 0.0
        %1391 = vmatpush1.msra.mxu0 0.0
        %1392 = vmatprep.subr.mxu0 0.0
        %1393 = vmatpush1.msra.mxu0 0.0
        %1394 = vmatprep.subr.mxu0 0.0
        %1395 = vmatpush1.msra.mxu0 0.0
        %1396 = vmatprep.mubr.f32.mxu0 0.0
        %1397 = vmatmul.mubr.f32.gmra.mrb[0].mxu0 %v1330
        %v1398 = vpop.f32.mrb[0].mxu0
        %v1399 = vadd.f32 0.0, %v1398
        %v1400 = vpop.f32.mrb[0].mxu0
        %1401 = vdwg.mxu0
        %1402 = vrot.lane.b32.xlu0 %v735, 112
        %v1403 = vpop.permute.xlu0 %1402
        %1404 = vrot.lane.b32.xlu0 %v735, 80
        %v1405 = vpop.permute.xlu0 %1404
        %v1406 = vsel %vm746, %v1403, 0
        %v1408 = vsel %vm746, %v1405, 0
        %1410 = vmatprep.subr.mxu0 0.0
        %1411 = vmatpush1.xpose.msra.mxu0 %v1408
        %1412 = vmatprep.subr.mxu0 0.0
        %1413 = vmatpush1.xpose.msra.mxu0 0.0
        %1414 = vmatprep.subr.mxu0 0.0
        %1415 = vmatpush1.xpose.msra.mxu0 0.0
        %1416 = vmatprep.subr.mxu0 0.0
        %1417 = vmatpush1.xpose.msra.mxu0 0.0
        %1418 = vmatprep.subr.mxu0 0.0
        %1419 = vmatpush1.xpose.msra.mxu0 0.0
        %1420 = vmatprep.subr.mxu0 0.0
        %1421 = vmatpush1.xpose.msra.mxu0 0.0
        %1422 = vmatprep.subr.mxu0 0.0
        %1423 = vmatpush1.xpose.msra.mxu0 0.0
        %1424 = vmatprep.subr.mxu0 0.0
        %1425 = vmatpush1.xpose.msra.mxu0 0.0
        %1426 = vmatprep.subr.mxu0 0.0
        %1427 = vmatpush1.xpose.msra.mxu0 0.0
        %1428 = vmatprep.subr.mxu0 0.0
        %1429 = vmatpush1.xpose.msra.mxu0 0.0
        %1430 = vmatprep.subr.mxu0 0.0
        %1431 = vmatpush1.xpose.msra.mxu0 0.0
        %1432 = vmatprep.subr.mxu0 0.0
        %1433 = vmatpush1.xpose.msra.mxu0 0.0
        %1434 = vmatprep.subr.mxu0 0.0
        %1435 = vmatpush1.xpose.msra.mxu0 0.0
        %1436 = vmatprep.subr.mxu0 0.0
        %1437 = vmatpush1.xpose.msra.mxu0 0.0
        %1438 = vmatprep.subr.mxu0 0.0
        %1439 = vmatpush1.xpose.msra.mxu0 0.0
        %1440 = vmatprep.subr.mxu0 0.0
        %1441 = vmatpush1.xpose.msra.mxu0 0.0
        %1442 = vmatprep.subr.mxu0 0.0
        %1443 = vmatpush1.xpose.msra.mxu0 0.0
        %1444 = vmatprep.subr.mxu0 0.0
        %1445 = vmatpush1.xpose.msra.mxu0 0.0
        %1446 = vmatprep.subr.mxu0 0.0
        %1447 = vmatpush1.xpose.msra.mxu0 0.0
        %1448 = vmatprep.subr.mxu0 0.0
        %1449 = vmatpush1.xpose.msra.mxu0 0.0
        %1450 = vmatprep.subr.mxu0 0.0
        %1451 = vmatpush1.xpose.msra.mxu0 0.0
        %1452 = vmatprep.subr.mxu0 0.0
        %1453 = vmatpush1.xpose.msra.mxu0 0.0
        %1454 = vmatprep.subr.mxu0 0.0
        %1455 = vmatpush1.xpose.msra.mxu0 0.0
        %1456 = vmatprep.subr.mxu0 0.0
        %1457 = vmatpush1.xpose.msra.mxu0 0.0
        %1458 = vmatprep.subr.mxu0 0.0
        %1459 = vmatpush1.xpose.msra.mxu0 0.0
        %1460 = vmatprep.subr.mxu0 0.0
        %1461 = vmatpush1.xpose.msra.mxu0 0.0
        %1462 = vmatprep.subr.mxu0 0.0
        %1463 = vmatpush1.xpose.msra.mxu0 0.0
        %1464 = vmatprep.subr.mxu0 0.0
        %1465 = vmatpush1.xpose.msra.mxu0 0.0
        %1466 = vmatprep.subr.mxu0 0.0
        %1467 = vmatpush1.xpose.msra.mxu0 0.0
        %1468 = vmatprep.subr.mxu0 0.0
        %1469 = vmatpush1.xpose.msra.mxu0 0.0
        %1470 = vmatprep.subr.mxu0 0.0
        %1471 = vmatpush1.xpose.msra.mxu0 0.0
        %1472 = vmatprep.subr.mxu0 0.0
        %1473 = vmatpush1.xpose.msra.mxu0 0.0
        %1474 = vmatprep.mubr.f32.mxu0 0.0
        %1475 = vmatmul.mubr.f32.gmra.mrb[0].mxu0 %v1406
        %v1476 = vpop.f32.mrb[0].mxu0
        %v1477 = vadd.f32 0.0, %v1476
        %v1478 = vpop.f32.mrb[0].mxu0
        %1479 = vdwg.mxu0
        %1480 = vrot.lane.b32.xlu0 %v740, 112
        %v1481 = vpop.permute.xlu0 %1480
        %1482 = vrot.lane.b32.xlu0 %v740, 80
        %v1483 = vpop.permute.xlu0 %1482
        %v1484 = vsel %vm746, %v1481, 0
        %v1486 = vsel %vm746, %v1483, 0
        %1488 = vmatprep.subr.mxu0 0.0
        %1489 = vmatpush1.xpose.msra.mxu0 %v1486
        %1490 = vmatprep.subr.mxu0 0.0
        %1491 = vmatpush1.xpose.msra.mxu0 0.0
        %1492 = vmatprep.subr.mxu0 0.0
        %1493 = vmatpush1.xpose.msra.mxu0 0.0
        %1494 = vmatprep.subr.mxu0 0.0
        %1495 = vmatpush1.xpose.msra.mxu0 0.0
        %1496 = vmatprep.subr.mxu0 0.0
        %1497 = vmatpush1.xpose.msra.mxu0 0.0
        %1498 = vmatprep.subr.mxu0 0.0
        %1499 = vmatpush1.xpose.msra.mxu0 0.0
        %1500 = vmatprep.subr.mxu0 0.0
        %1501 = vmatpush1.xpose.msra.mxu0 0.0
        %1502 = vmatprep.subr.mxu0 0.0
        %1503 = vmatpush1.xpose.msra.mxu0 0.0
        %1504 = vmatprep.subr.mxu0 0.0
        %1505 = vmatpush1.xpose.msra.mxu0 0.0
        %1506 = vmatprep.subr.mxu0 0.0
        %1507 = vmatpush1.xpose.msra.mxu0 0.0
        %1508 = vmatprep.subr.mxu0 0.0
        %1509 = vmatpush1.xpose.msra.mxu0 0.0
        %1510 = vmatprep.subr.mxu0 0.0
        %1511 = vmatpush1.xpose.msra.mxu0 0.0
        %1512 = vmatprep.subr.mxu0 0.0
        %1513 = vmatpush1.xpose.msra.mxu0 0.0
        %1514 = vmatprep.subr.mxu0 0.0
        %1515 = vmatpush1.xpose.msra.mxu0 0.0
        %1516 = vmatprep.subr.mxu0 0.0
        %1517 = vmatpush1.xpose.msra.mxu0 0.0
        %1518 = vmatprep.subr.mxu0 0.0
        %1519 = vmatpush1.xpose.msra.mxu0 0.0
        %1520 = vmatprep.subr.mxu0 0.0
        %1521 = vmatpush1.xpose.msra.mxu0 0.0
        %1522 = vmatprep.subr.mxu0 0.0
        %1523 = vmatpush1.xpose.msra.mxu0 0.0
        %1524 = vmatprep.subr.mxu0 0.0
        %1525 = vmatpush1.xpose.msra.mxu0 0.0
        %1526 = vmatprep.subr.mxu0 0.0
        %1527 = vmatpush1.xpose.msra.mxu0 0.0
        %1528 = vmatprep.subr.mxu0 0.0
        %1529 = vmatpush1.xpose.msra.mxu0 0.0
        %1530 = vmatprep.subr.mxu0 0.0
        %1531 = vmatpush1.xpose.msra.mxu0 0.0
        %1532 = vmatprep.subr.mxu0 0.0
        %1533 = vmatpush1.xpose.msra.mxu0 0.0
        %1534 = vmatprep.subr.mxu0 0.0
        %1535 = vmatpush1.xpose.msra.mxu0 0.0
        %1536 = vmatprep.subr.mxu0 0.0
        %1537 = vmatpush1.xpose.msra.mxu0 0.0
        %1538 = vmatprep.subr.mxu0 0.0
        %1539 = vmatpush1.xpose.msra.mxu0 0.0
        %1540 = vmatprep.subr.mxu0 0.0
        %1541 = vmatpush1.xpose.msra.mxu0 0.0
        %1542 = vmatprep.subr.mxu0 0.0
        %1543 = vmatpush1.xpose.msra.mxu0 0.0
        %1544 = vmatprep.subr.mxu0 0.0
        %1545 = vmatpush1.xpose.msra.mxu0 0.0
        %1546 = vmatprep.subr.mxu0 0.0
        %1547 = vmatpush1.xpose.msra.mxu0 0.0
        %1548 = vmatprep.subr.mxu0 0.0
        %1549 = vmatpush1.xpose.msra.mxu0 0.0
        %1550 = vmatprep.subr.mxu0 0.0
        %1551 = vmatpush1.xpose.msra.mxu0 0.0
        %1552 = vmatprep.mubr.f32.mxu0 0.0
        %1553 = vmatmul.mubr.f32.gmra.mrb[0].mxu0 %v1484
        %v1554 = vpop.f32.mrb[0].mxu0
        %v1555 = vadd.f32 0.0, %v1554
        %v1556 = vpop.f32.mrb[0].mxu0
        %1557 = vdwg.mxu0
        %v1558 = vsel %vm746, %v1477, -inf
        %1559 = vmax.xlane.f32.xlu0 %v1558
        %v1560 = vpop.xlane.xlu0 %1559
        %v1561 = vsel %vm746, %v1555, -inf
        %1562 = vmax.xlane.f32.xlu0 %v1561
        %v1563 = vpop.xlane.xlu0 %1562
        %v1564 = vsub.f32 %v1477, %v1560
        %v1565 = vsub.f32 %v1555, %v1563
        %v1566 = vmul.f32 %v1564, 1.442695
        %v1567 = vpow.pop %v1566
        %v1568 = vmul.f32 %v1565, 1.442695
        %v1569 = vpow.pop %v1568
        %v1570 = vsel %vm746, %v1567, 0.0
        %1571 = vadd.xlane.f32.xlu0 %v1570
        %v1572 = vpop.xlane.xlu0 %1571
        %v1573 = vsel %vm746, %v1569, 0.0
        %1574 = vadd.xlane.f32.xlu0 %v1573
        %v1575 = vpop.xlane.xlu0 %1574
        %v1576 = vrcp.pop %v1572
        %v1577 = vrcp.pop %v1575
        %v1578 = vmul.f32 %v1567, %v1576
        %v1579 = vmul.f32 %v1569, %v1577
        %1580 = vrot.lane.b32.xlu0 %v735, 48
        %v1581 = vpop.permute.xlu0 %1580
        %v1584 = vsel %vm746, %v1578, 0
        %1586 = vmatprep.subr.mxu0 0.0
        %1587 = vmatpush1.msra.mxu0 %v1581
        %1588 = vmatprep.subr.mxu0 0.0
        %1589 = vmatpush1.msra.mxu0 0.0
        %1590 = vmatprep.subr.mxu0 0.0
        %1591 = vmatpush1.msra.mxu0 0.0
        %1592 = vmatprep.subr.mxu0 0.0
        %1593 = vmatpush1.msra.mxu0 0.0
        %1594 = vmatprep.subr.mxu0 0.0
        %1595 = vmatpush1.msra.mxu0 0.0
        %1596 = vmatprep.subr.mxu0 0.0
        %1597 = vmatpush1.msra.mxu0 0.0
        %1598 = vmatprep.subr.mxu0 0.0
        %1599 = vmatpush1.msra.mxu0 0.0
        %1600 = vmatprep.subr.mxu0 0.0
        %1601 = vmatpush1.msra.mxu0 0.0
        %1602 = vmatprep.subr.mxu0 0.0
        %1603 = vmatpush1.msra.mxu0 0.0
        %1604 = vmatprep.subr.mxu0 0.0
        %1605 = vmatpush1.msra.mxu0 0.0
        %1606 = vmatprep.subr.mxu0 0.0
        %1607 = vmatpush1.msra.mxu0 0.0
        %1608 = vmatprep.subr.mxu0 0.0
        %1609 = vmatpush1.msra.mxu0 0.0
        %1610 = vmatprep.subr.mxu0 0.0
        %1611 = vmatpush1.msra.mxu0 0.0
        %1612 = vmatprep.subr.mxu0 0.0
        %1613 = vmatpush1.msra.mxu0 0.0
        %1614 = vmatprep.subr.mxu0 0.0
        %1615 = vmatpush1.msra.mxu0 0.0
        %1616 = vmatprep.subr.mxu0 0.0
        %1617 = vmatpush1.msra.mxu0 0.0
        %1618 = vmatprep.subr.mxu0 0.0
        %1619 = vmatpush1.msra.mxu0 0.0
        %1620 = vmatprep.subr.mxu0 0.0
        %1621 = vmatpush1.msra.mxu0 0.0
        %1622 = vmatprep.subr.mxu0 0.0
        %1623 = vmatpush1.msra.mxu0 0.0
        %1624 = vmatprep.subr.mxu0 0.0
        %1625 = vmatpush1.msra.mxu0 0.0
        %1626 = vmatprep.subr.mxu0 0.0
        %1627 = vmatpush1.msra.mxu0 0.0
        %1628 = vmatprep.subr.mxu0 0.0
        %1629 = vmatpush1.msra.mxu0 0.0
        %1630 = vmatprep.subr.mxu0 0.0
        %1631 = vmatpush1.msra.mxu0 0.0
        %1632 = vmatprep.subr.mxu0 0.0
        %1633 = vmatpush1.msra.mxu0 0.0
        %1634 = vmatprep.subr.mxu0 0.0
        %1635 = vmatpush1.msra.mxu0 0.0
        %1636 = vmatprep.subr.mxu0 0.0
        %1637 = vmatpush1.msra.mxu0 0.0
        %1638 = vmatprep.subr.mxu0 0.0
        %1639 = vmatpush1.msra.mxu0 0.0
        %1640 = vmatprep.subr.mxu0 0.0
        %1641 = vmatpush1.msra.mxu0 0.0
        %1642 = vmatprep.subr.mxu0 0.0
        %1643 = vmatpush1.msra.mxu0 0.0
        %1644 = vmatprep.subr.mxu0 0.0
        %1645 = vmatpush1.msra.mxu0 0.0
        %1646 = vmatprep.subr.mxu0 0.0
        %1647 = vmatpush1.msra.mxu0 0.0
        %1648 = vmatprep.subr.mxu0 0.0
        %1649 = vmatpush1.msra.mxu0 0.0
        %1650 = vmatprep.mubr.f32.mxu0 0.0
        %1651 = vmatmul.mubr.f32.gmra.mrb[0].mxu0 %v1584
        %v1652 = vpop.f32.mrb[0].mxu0
        %v1653 = vadd.f32 0.0, %v1652
        %v1654 = vpop.f32.mrb[0].mxu0
        %1655 = vdwg.mxu0
        %1656 = vrot.lane.b32.xlu0 %v740, 48
        %v1657 = vpop.permute.xlu0 %1656
        %v1660 = vsel %vm746, %v1579, 0
        %1662 = vmatprep.subr.mxu0 0.0
        %1663 = vmatpush1.msra.mxu0 %v1657
        %1664 = vmatprep.subr.mxu0 0.0
        %1665 = vmatpush1.msra.mxu0 0.0
        %1666 = vmatprep.subr.mxu0 0.0
        %1667 = vmatpush1.msra.mxu0 0.0
        %1668 = vmatprep.subr.mxu0 0.0
        %1669 = vmatpush1.msra.mxu0 0.0
        %1670 = vmatprep.subr.mxu0 0.0
        %1671 = vmatpush1.msra.mxu0 0.0
        %1672 = vmatprep.subr.mxu0 0.0
        %1673 = vmatpush1.msra.mxu0 0.0
        %1674 = vmatprep.subr.mxu0 0.0
        %1675 = vmatpush1.msra.mxu0 0.0
        %1676 = vmatprep.subr.mxu0 0.0
        %1677 = vmatpush1.msra.mxu0 0.0
        %1678 = vmatprep.subr.mxu0 0.0
        %1679 = vmatpush1.msra.mxu0 0.0
        %1680 = vmatprep.subr.mxu0 0.0
        %1681 = vmatpush1.msra.mxu0 0.0
        %1682 = vmatprep.subr.mxu0 0.0
        %1683 = vmatpush1.msra.mxu0 0.0
        %1684 = vmatprep.subr.mxu0 0.0
        %1685 = vmatpush1.msra.mxu0 0.0
        %1686 = vmatprep.subr.mxu0 0.0
        %1687 = vmatpush1.msra.mxu0 0.0
        %1688 = vmatprep.subr.mxu0 0.0
        %1689 = vmatpush1.msra.mxu0 0.0
        %1690 = vmatprep.subr.mxu0 0.0
        %1691 = vmatpush1.msra.mxu0 0.0
        %1692 = vmatprep.subr.mxu0 0.0
        %1693 = vmatpush1.msra.mxu0 0.0
        %1694 = vmatprep.subr.mxu0 0.0
        %1695 = vmatpush1.msra.mxu0 0.0
        %1696 = vmatprep.subr.mxu0 0.0
        %1697 = vmatpush1.msra.mxu0 0.0
        %1698 = vmatprep.subr.mxu0 0.0
        %1699 = vmatpush1.msra.mxu0 0.0
        %1700 = vmatprep.subr.mxu0 0.0
        %1701 = vmatpush1.msra.mxu0 0.0
        %1702 = vmatprep.subr.mxu0 0.0
        %1703 = vmatpush1.msra.mxu0 0.0
        %1704 = vmatprep.subr.mxu0 0.0
        %1705 = vmatpush1.msra.mxu0 0.0
        %1706 = vmatprep.subr.mxu0 0.0
        %1707 = vmatpush1.msra.mxu0 0.0
        %1708 = vmatprep.subr.mxu0 0.0
        %1709 = vmatpush1.msra.mxu0 0.0
        %1710 = vmatprep.subr.mxu0 0.0
        %1711 = vmatpush1.msra.mxu0 0.0
        %1712 = vmatprep.subr.mxu0 0.0
        %1713 = vmatpush1.msra.mxu0 0.0
        %1714 = vmatprep.subr.mxu0 0.0
        %1715 = vmatpush1.msra.mxu0 0.0
        %1716 = vmatprep.subr.mxu0 0.0
        %1717 = vmatpush1.msra.mxu0 0.0
        %1718 = vmatprep.subr.mxu0 0.0
        %1719 = vmatpush1.msra.mxu0 0.0
        %1720 = vmatprep.subr.mxu0 0.0
        %1721 = vmatpush1.msra.mxu0 0.0
        %1722 = vmatprep.subr.mxu0 0.0
        %1723 = vmatpush1.msra.mxu0 0.0
        %1724 = vmatprep.subr.mxu0 0.0
        %1725 = vmatpush1.msra.mxu0 0.0
        %1726 = vmatprep.mubr.f32.mxu0 0.0
        %1727 = vmatmul.mubr.f32.gmra.mrb[0].mxu0 %v1660
        %v1728 = vpop.f32.mrb[0].mxu0
        %v1729 = vadd.f32 0.0, %v1728
        %v1730 = vpop.f32.mrb[0].mxu0
        %1731 = vdwg.mxu0
        %1732 = vrot.lane.b32.xlu0 %v735, 104
        %v1733 = vpop.permute.xlu0 %1732
        %1734 = vrot.lane.b32.xlu0 %v735, 72
        %v1735 = vpop.permute.xlu0 %1734
        %v1736 = vsel %vm746, %v1733, 0
        %v1738 = vsel %vm746, %v1735, 0
        %1740 = vmatprep.subr.mxu0 0.0
        %1741 = vmatpush1.xpose.msra.mxu0 %v1738
        %1742 = vmatprep.subr.mxu0 0.0
        %1743 = vmatpush1.xpose.msra.mxu0 0.0
        %1744 = vmatprep.subr.mxu0 0.0
        %1745 = vmatpush1.xpose.msra.mxu0 0.0
        %1746 = vmatprep.subr.mxu0 0.0
        %1747 = vmatpush1.xpose.msra.mxu0 0.0
        %1748 = vmatprep.subr.mxu0 0.0
        %1749 = vmatpush1.xpose.msra.mxu0 0.0
        %1750 = vmatprep.subr.mxu0 0.0
        %1751 = vmatpush1.xpose.msra.mxu0 0.0
        %1752 = vmatprep.subr.mxu0 0.0
        %1753 = vmatpush1.xpose.msra.mxu0 0.0
        %1754 = vmatprep.subr.mxu0 0.0
        %1755 = vmatpush1.xpose.msra.mxu0 0.0
        %1756 = vmatprep.subr.mxu0 0.0
        %1757 = vmatpush1.xpose.msra.mxu0 0.0
        %1758 = vmatprep.subr.mxu0 0.0
        %1759 = vmatpush1.xpose.msra.mxu0 0.0
        %1760 = vmatprep.subr.mxu0 0.0
        %1761 = vmatpush1.xpose.msra.mxu0 0.0
        %1762 = vmatprep.subr.mxu0 0.0
        %1763 = vmatpush1.xpose.msra.mxu0 0.0
        %1764 = vmatprep.subr.mxu0 0.0
        %1765 = vmatpush1.xpose.msra.mxu0 0.0
        %1766 = vmatprep.subr.mxu0 0.0
        %1767 = vmatpush1.xpose.msra.mxu0 0.0
        %1768 = vmatprep.subr.mxu0 0.0
        %1769 = vmatpush1.xpose.msra.mxu0 0.0
        %1770 = vmatprep.subr.mxu0 0.0
        %1771 = vmatpush1.xpose.msra.mxu0 0.0
        %1772 = vmatprep.subr.mxu0 0.0
        %1773 = vmatpush1.xpose.msra.mxu0 0.0
        %1774 = vmatprep.subr.mxu0 0.0
        %1775 = vmatpush1.xpose.msra.mxu0 0.0
        %1776 = vmatprep.subr.mxu0 0.0
        %1777 = vmatpush1.xpose.msra.mxu0 0.0
        %1778 = vmatprep.subr.mxu0 0.0
        %1779 = vmatpush1.xpose.msra.mxu0 0.0
        %1780 = vmatprep.subr.mxu0 0.0
        %1781 = vmatpush1.xpose.msra.mxu0 0.0
        %1782 = vmatprep.subr.mxu0 0.0
        %1783 = vmatpush1.xpose.msra.mxu0 0.0
        %1784 = vmatprep.subr.mxu0 0.0
        %1785 = vmatpush1.xpose.msra.mxu0 0.0
        %1786 = vmatprep.subr.mxu0 0.0
        %1787 = vmatpush1.xpose.msra.mxu0 0.0
        %1788 = vmatprep.subr.mxu0 0.0
        %1789 = vmatpush1.xpose.msra.mxu0 0.0
        %1790 = vmatprep.subr.mxu0 0.0
        %1791 = vmatpush1.xpose.msra.mxu0 0.0
        %1792 = vmatprep.subr.mxu0 0.0
        %1793 = vmatpush1.xpose.msra.mxu0 0.0
        %1794 = vmatprep.subr.mxu0 0.0
        %1795 = vmatpush1.xpose.msra.mxu0 0.0
        %1796 = vmatprep.subr.mxu0 0.0
        %1797 = vmatpush1.xpose.msra.mxu0 0.0
        %1798 = vmatprep.subr.mxu0 0.0
        %1799 = vmatpush1.xpose.msra.mxu0 0.0
        %1800 = vmatprep.subr.mxu0 0.0
        %1801 = vmatpush1.xpose.msra.mxu0 0.0
        %1802 = vmatprep.subr.mxu0 0.0
        %1803 = vmatpush1.xpose.msra.mxu0 0.0
        %1804 = vmatprep.mubr.f32.mxu0 0.0
        %1805 = vmatmul.mubr.f32.gmra.mrb[0].mxu0 %v1736
        %v1806 = vpop.f32.mrb[0].mxu0
        %v1807 = vadd.f32 0.0, %v1806
        %v1808 = vpop.f32.mrb[0].mxu0
        %1809 = vdwg.mxu0
        %1810 = vrot.lane.b32.xlu0 %v740, 104
        %v1811 = vpop.permute.xlu0 %1810
        %1812 = vrot.lane.b32.xlu0 %v740, 72
        %v1813 = vpop.permute.xlu0 %1812
        %v1814 = vsel %vm746, %v1811, 0
        %v1816 = vsel %vm746, %v1813, 0
        %1818 = vmatprep.subr.mxu0 0.0
        %1819 = vmatpush1.xpose.msra.mxu0 %v1816
        %1820 = vmatprep.subr.mxu0 0.0
        %1821 = vmatpush1.xpose.msra.mxu0 0.0
        %1822 = vmatprep.subr.mxu0 0.0
        %1823 = vmatpush1.xpose.msra.mxu0 0.0
        %1824 = vmatprep.subr.mxu0 0.0
        %1825 = vmatpush1.xpose.msra.mxu0 0.0
        %1826 = vmatprep.subr.mxu0 0.0
        %1827 = vmatpush1.xpose.msra.mxu0 0.0
        %1828 = vmatprep.subr.mxu0 0.0
        %1829 = vmatpush1.xpose.msra.mxu0 0.0
        %1830 = vmatprep.subr.mxu0 0.0
        %1831 = vmatpush1.xpose.msra.mxu0 0.0
        %1832 = vmatprep.subr.mxu0 0.0
        %1833 = vmatpush1.xpose.msra.mxu0 0.0
        %1834 = vmatprep.subr.mxu0 0.0
        %1835 = vmatpush1.xpose.msra.mxu0 0.0
        %1836 = vmatprep.subr.mxu0 0.0
        %1837 = vmatpush1.xpose.msra.mxu0 0.0
        %1838 = vmatprep.subr.mxu0 0.0
        %1839 = vmatpush1.xpose.msra.mxu0 0.0
        %1840 = vmatprep.subr.mxu0 0.0
        %1841 = vmatpush1.xpose.msra.mxu0 0.0
        %1842 = vmatprep.subr.mxu0 0.0
        %1843 = vmatpush1.xpose.msra.mxu0 0.0
        %1844 = vmatprep.subr.mxu0 0.0
        %1845 = vmatpush1.xpose.msra.mxu0 0.0
        %1846 = vmatprep.subr.mxu0 0.0
        %1847 = vmatpush1.xpose.msra.mxu0 0.0
        %1848 = vmatprep.subr.mxu0 0.0
        %1849 = vmatpush1.xpose.msra.mxu0 0.0
        %1850 = vmatprep.subr.mxu0 0.0
        %1851 = vmatpush1.xpose.msra.mxu0 0.0
        %1852 = vmatprep.subr.mxu0 0.0
        %1853 = vmatpush1.xpose.msra.mxu0 0.0
        %1854 = vmatprep.subr.mxu0 0.0
        %1855 = vmatpush1.xpose.msra.mxu0 0.0
        %1856 = vmatprep.subr.mxu0 0.0
        %1857 = vmatpush1.xpose.msra.mxu0 0.0
        %1858 = vmatprep.subr.mxu0 0.0
        %1859 = vmatpush1.xpose.msra.mxu0 0.0
        %1860 = vmatprep.subr.mxu0 0.0
        %1861 = vmatpush1.xpose.msra.mxu0 0.0
        %1862 = vmatprep.subr.mxu0 0.0
        %1863 = vmatpush1.xpose.msra.mxu0 0.0
        %1864 = vmatprep.subr.mxu0 0.0
        %1865 = vmatpush1.xpose.msra.mxu0 0.0
        %1866 = vmatprep.subr.mxu0 0.0
        %1867 = vmatpush1.xpose.msra.mxu0 0.0
        %1868 = vmatprep.subr.mxu0 0.0
        %1869 = vmatpush1.xpose.msra.mxu0 0.0
        %1870 = vmatprep.subr.mxu0 0.0
        %1871 = vmatpush1.xpose.msra.mxu0 0.0
        %1872 = vmatprep.subr.mxu0 0.0
        %1873 = vmatpush1.xpose.msra.mxu0 0.0
        %1874 = vmatprep.subr.mxu0 0.0
        %1875 = vmatpush1.xpose.msra.mxu0 0.0
        %1876 = vmatprep.subr.mxu0 0.0
        %1877 = vmatpush1.xpose.msra.mxu0 0.0
        %1878 = vmatprep.subr.mxu0 0.0
        %1879 = vmatpush1.xpose.msra.mxu0 0.0
        %1880 = vmatprep.subr.mxu0 0.0
        %1881 = vmatpush1.xpose.msra.mxu0 0.0
        %1882 = vmatprep.mubr.f32.mxu0 0.0
        %1883 = vmatmul.mubr.f32.gmra.mrb[0].mxu0 %v1814
        %v1884 = vpop.f32.mrb[0].mxu0
        %v1885 = vadd.f32 0.0, %v1884
        %v1886 = vpop.f32.mrb[0].mxu0
        %1887 = vdwg.mxu0
        %v1888 = vsel %vm746, %v1807, -inf
        %1889 = vmax.xlane.f32.xlu0 %v1888
        %v1890 = vpop.xlane.xlu0 %1889
        %v1891 = vsel %vm746, %v1885, -inf
        %1892 = vmax.xlane.f32.xlu0 %v1891
        %v1893 = vpop.xlane.xlu0 %1892
        %v1894 = vsub.f32 %v1807, %v1890
        %v1895 = vsub.f32 %v1885, %v1893
        %v1896 = vmul.f32 %v1894, 1.442695
        %v1897 = vpow.pop %v1896
        %v1898 = vmul.f32 %v1895, 1.442695
        %v1899 = vpow.pop %v1898
        %v1900 = vsel %vm746, %v1897, 0.0
        %1901 = vadd.xlane.f32.xlu0 %v1900
        %v1902 = vpop.xlane.xlu0 %1901
        %v1903 = vsel %vm746, %v1899, 0.0
        %1904 = vadd.xlane.f32.xlu0 %v1903
        %v1905 = vpop.xlane.xlu0 %1904
        %v1906 = vrcp.pop %v1902
        %v1907 = vrcp.pop %v1905
        %v1908 = vmul.f32 %v1897, %v1906
        %v1909 = vmul.f32 %v1899, %v1907
        %1910 = vrot.lane.b32.xlu0 %v735, 40
        %v1911 = vpop.permute.xlu0 %1910
        %v1914 = vsel %vm746, %v1908, 0
        %1916 = vmatprep.subr.mxu0 0.0
        %1917 = vmatpush1.msra.mxu0 %v1911
        %1918 = vmatprep.subr.mxu0 0.0
        %1919 = vmatpush1.msra.mxu0 0.0
        %1920 = vmatprep.subr.mxu0 0.0
        %1921 = vmatpush1.msra.mxu0 0.0
        %1922 = vmatprep.subr.mxu0 0.0
        %1923 = vmatpush1.msra.mxu0 0.0
        %1924 = vmatprep.subr.mxu0 0.0
        %1925 = vmatpush1.msra.mxu0 0.0
        %1926 = vmatprep.subr.mxu0 0.0
        %1927 = vmatpush1.msra.mxu0 0.0
        %1928 = vmatprep.subr.mxu0 0.0
        %1929 = vmatpush1.msra.mxu0 0.0
        %1930 = vmatprep.subr.mxu0 0.0
        %1931 = vmatpush1.msra.mxu0 0.0
        %1932 = vmatprep.subr.mxu0 0.0
        %1933 = vmatpush1.msra.mxu0 0.0
        %1934 = vmatprep.subr.mxu0 0.0
        %1935 = vmatpush1.msra.mxu0 0.0
        %1936 = vmatprep.subr.mxu0 0.0
        %1937 = vmatpush1.msra.mxu0 0.0
        %1938 = vmatprep.subr.mxu0 0.0
        %1939 = vmatpush1.msra.mxu0 0.0
        %1940 = vmatprep.subr.mxu0 0.0
        %1941 = vmatpush1.msra.mxu0 0.0
        %1942 = vmatprep.subr.mxu0 0.0
        %1943 = vmatpush1.msra.mxu0 0.0
        %1944 = vmatprep.subr.mxu0 0.0
        %1945 = vmatpush1.msra.mxu0 0.0
        %1946 = vmatprep.subr.mxu0 0.0
        %1947 = vmatpush1.msra.mxu0 0.0
        %1948 = vmatprep.subr.mxu0 0.0
        %1949 = vmatpush1.msra.mxu0 0.0
        %1950 = vmatprep.subr.mxu0 0.0
        %1951 = vmatpush1.msra.mxu0 0.0
        %1952 = vmatprep.subr.mxu0 0.0
        %1953 = vmatpush1.msra.mxu0 0.0
        %1954 = vmatprep.subr.mxu0 0.0
        %1955 = vmatpush1.msra.mxu0 0.0
        %1956 = vmatprep.subr.mxu0 0.0
        %1957 = vmatpush1.msra.mxu0 0.0
        %1958 = vmatprep.subr.mxu0 0.0
        %1959 = vmatpush1.msra.mxu0 0.0
        %1960 = vmatprep.subr.mxu0 0.0
        %1961 = vmatpush1.msra.mxu0 0.0
        %1962 = vmatprep.subr.mxu0 0.0
        %1963 = vmatpush1.msra.mxu0 0.0
        %1964 = vmatprep.subr.mxu0 0.0
        %1965 = vmatpush1.msra.mxu0 0.0
        %1966 = vmatprep.subr.mxu0 0.0
        %1967 = vmatpush1.msra.mxu0 0.0
        %1968 = vmatprep.subr.mxu0 0.0
        %1969 = vmatpush1.msra.mxu0 0.0
        %1970 = vmatprep.subr.mxu0 0.0
        %1971 = vmatpush1.msra.mxu0 0.0
        %1972 = vmatprep.subr.mxu0 0.0
        %1973 = vmatpush1.msra.mxu0 0.0
        %1974 = vmatprep.subr.mxu0 0.0
        %1975 = vmatpush1.msra.mxu0 0.0
        %1976 = vmatprep.subr.mxu0 0.0
        %1977 = vmatpush1.msra.mxu0 0.0
        %1978 = vmatprep.subr.mxu0 0.0
        %1979 = vmatpush1.msra.mxu0 0.0
        %1980 = vmatprep.mubr.f32.mxu0 0.0
        %1981 = vmatmul.mubr.f32.gmra.mrb[0].mxu0 %v1914
        %v1982 = vpop.f32.mrb[0].mxu0
        %v1983 = vadd.f32 0.0, %v1982
        %v1984 = vpop.f32.mrb[0].mxu0
        %1985 = vdwg.mxu0
        %1986 = vrot.lane.b32.xlu0 %v740, 40
        %v1987 = vpop.permute.xlu0 %1986
        %v1990 = vsel %vm746, %v1909, 0
        %1992 = vmatprep.subr.mxu0 0.0
        %1993 = vmatpush1.msra.mxu0 %v1987
        %1994 = vmatprep.subr.mxu0 0.0
        %1995 = vmatpush1.msra.mxu0 0.0
        %1996 = vmatprep.subr.mxu0 0.0
        %1997 = vmatpush1.msra.mxu0 0.0
        %1998 = vmatprep.subr.mxu0 0.0
        %1999 = vmatpush1.msra.mxu0 0.0
        %2000 = vmatprep.subr.mxu0 0.0
        %2001 = vmatpush1.msra.mxu0 0.0
        %2002 = vmatprep.subr.mxu0 0.0
        %2003 = vmatpush1.msra.mxu0 0.0
        %2004 = vmatprep.subr.mxu0 0.0
        %2005 = vmatpush1.msra.mxu0 0.0
        %2006 = vmatprep.subr.mxu0 0.0
        %2007 = vmatpush1.msra.mxu0 0.0
        %2008 = vmatprep.subr.mxu0 0.0
        %2009 = vmatpush1.msra.mxu0 0.0
        %2010 = vmatprep.subr.mxu0 0.0
        %2011 = vmatpush1.msra.mxu0 0.0
        %2012 = vmatprep.subr.mxu0 0.0
        %2013 = vmatpush1.msra.mxu0 0.0
        %2014 = vmatprep.subr.mxu0 0.0
        %2015 = vmatpush1.msra.mxu0 0.0
        %2016 = vmatprep.subr.mxu0 0.0
        %2017 = vmatpush1.msra.mxu0 0.0
        %2018 = vmatprep.subr.mxu0 0.0
        %2019 = vmatpush1.msra.mxu0 0.0
        %2020 = vmatprep.subr.mxu0 0.0
        %2021 = vmatpush1.msra.mxu0 0.0
        %2022 = vmatprep.subr.mxu0 0.0
        %2023 = vmatpush1.msra.mxu0 0.0
        %2024 = vmatprep.subr.mxu0 0.0
        %2025 = vmatpush1.msra.mxu0 0.0
        %2026 = vmatprep.subr.mxu0 0.0
        %2027 = vmatpush1.msra.mxu0 0.0
        %2028 = vmatprep.subr.mxu0 0.0
        %2029 = vmatpush1.msra.mxu0 0.0
        %2030 = vmatprep.subr.mxu0 0.0
        %2031 = vmatpush1.msra.mxu0 0.0
        %2032 = vmatprep.subr.mxu0 0.0
        %2033 = vmatpush1.msra.mxu0 0.0
        %2034 = vmatprep.subr.mxu0 0.0
        %2035 = vmatpush1.msra.mxu0 0.0
        %2036 = vmatprep.subr.mxu0 0.0
        %2037 = vmatpush1.msra.mxu0 0.0
        %2038 = vmatprep.subr.mxu0 0.0
        %2039 = vmatpush1.msra.mxu0 0.0
        %2040 = vmatprep.subr.mxu0 0.0
        %2041 = vmatpush1.msra.mxu0 0.0
        %2042 = vmatprep.subr.mxu0 0.0
        %2043 = vmatpush1.msra.mxu0 0.0
        %2044 = vmatprep.subr.mxu0 0.0
        %2045 = vmatpush1.msra.mxu0 0.0
        %2046 = vmatprep.subr.mxu0 0.0
        %2047 = vmatpush1.msra.mxu0 0.0
        %2048 = vmatprep.subr.mxu0 0.0
        %2049 = vmatpush1.msra.mxu0 0.0
        %2050 = vmatprep.subr.mxu0 0.0
        %2051 = vmatpush1.msra.mxu0 0.0
        %2052 = vmatprep.subr.mxu0 0.0
        %2053 = vmatpush1.msra.mxu0 0.0
        %2054 = vmatprep.subr.mxu0 0.0
        %2055 = vmatpush1.msra.mxu0 0.0
        %2056 = vmatprep.mubr.f32.mxu0 0.0
        %2057 = vmatmul.mubr.f32.gmra.mrb[0].mxu0 %v1990
        %v2058 = vpop.f32.mrb[0].mxu0
        %v2059 = vadd.f32 0.0, %v2058
        %v2060 = vpop.f32.mrb[0].mxu0
        %2061 = vdwg.mxu0
        %2064 = vrot.lane.b32.xlu0 %v1323, 8
        %v2065 = vpop.permute.xlu0 %2064
        %2066 = vrot.lane.b32.xlu0 %v1399, 8
        %v2067 = vpop.permute.xlu0 %2066
        %2072 = vrot.lane.b32.xlu0 %v1653, 16
        %v2073 = vpop.permute.xlu0 %2072
        %2074 = vrot.lane.b32.xlu0 %v1729, 16
        %v2075 = vpop.permute.xlu0 %2074
        %2080 = vrot.lane.b32.xlu0 %v1983, 24
        %v2081 = vpop.permute.xlu0 %2080
        %2082 = vrot.lane.b32.xlu0 %v2059, 24
        %v2083 = vpop.permute.xlu0 %2082
        %v2086 = vsel %vm746, %v993, %v2065
        %v2087 = vsel %vm746, %v1069, %v2067
        %vm2088 = vcmask 130048
        %v2089 = vsel %vm2088, %v2086, %v2073
        %v2090 = vsel %vm2088, %v2087, %v2075
        %vm2091 = vcmask 195584
        %v2092 = vsel %vm2091, %v2089, %v2081
        %v2093 = vsel %vm2091, %v2090, %v2083
        %v2094 = vld [vmem:[%s606] sm:$0xff]
        %v2095 = vld [vmem:[%s606 + $0x8] sm:$0xff]
        %v2096 = vld [vmem:[%s606 + $0x10] sm:$0xff]
        %v2097 = vld [vmem:[%s606 + $0x18] sm:$0xff]
        %v2098 = vld [vmem:[%s609] sm:$0x1]
        %v2100 = vlaneseq
        %v2101 = vshrl.u32 %v2100, 7
        %v2102 = vsub.s32 0, %v2101
        %v2103 = vrot.slane %v2098, %v2102
        %v2106 = vsel %vm661, %v2092, 0
        %v2109 = vsel %vm661, %v2093, 0
        %2111 = vmatprep.subr.mxu0 0.0
        %2112 = vmatpush1.msra.mxu0 %v2094
        %2113 = vmatprep.subr.mxu0 0.0
        %2114 = vmatpush1.msra.mxu0 %v2095
        %2115 = vmatprep.subr.mxu0 0.0
        %2116 = vmatpush1.msra.mxu0 %v2096
        %2117 = vmatprep.subr.mxu0 0.0
        %2118 = vmatpush1.msra.mxu0 %v2097
        %2119 = vmatprep.subr.mxu0 0.0
        %2120 = vmatpush1.msra.mxu0 0.0
        %2121 = vmatprep.subr.mxu0 0.0
        %2122 = vmatpush1.msra.mxu0 0.0
        %2123 = vmatprep.subr.mxu0 0.0
        %2124 = vmatpush1.msra.mxu0 0.0
        %2125 = vmatprep.subr.mxu0 0.0
        %2126 = vmatpush1.msra.mxu0 0.0
        %2127 = vmatprep.subr.mxu0 0.0
        %2128 = vmatpush1.msra.mxu0 0.0
        %2129 = vmatprep.subr.mxu0 0.0
        %2130 = vmatpush1.msra.mxu0 0.0
        %2131 = vmatprep.subr.mxu0 0.0
        %2132 = vmatpush1.msra.mxu0 0.0
        %2133 = vmatprep.subr.mxu0 0.0
        %2134 = vmatpush1.msra.mxu0 0.0
        %2135 = vmatprep.subr.mxu0 0.0
        %2136 = vmatpush1.msra.mxu0 0.0
        %2137 = vmatprep.subr.mxu0 0.0
        %2138 = vmatpush1.msra.mxu0 0.0
        %2139 = vmatprep.subr.mxu0 0.0
        %2140 = vmatpush1.msra.mxu0 0.0
        %2141 = vmatprep.subr.mxu0 0.0
        %2142 = vmatpush1.msra.mxu0 0.0
        %2143 = vmatprep.subr.mxu0 0.0
        %2144 = vmatpush1.msra.mxu0 0.0
        %2145 = vmatprep.subr.mxu0 0.0
        %2146 = vmatpush1.msra.mxu0 0.0
        %2147 = vmatprep.subr.mxu0 0.0
        %2148 = vmatpush1.msra.mxu0 0.0
        %2149 = vmatprep.subr.mxu0 0.0
        %2150 = vmatpush1.msra.mxu0 0.0
        %2151 = vmatprep.subr.mxu0 0.0
        %2152 = vmatpush1.msra.mxu0 0.0
        %2153 = vmatprep.subr.mxu0 0.0
        %2154 = vmatpush1.msra.mxu0 0.0
        %2155 = vmatprep.subr.mxu0 0.0
        %2156 = vmatpush1.msra.mxu0 0.0
        %2157 = vmatprep.subr.mxu0 0.0
        %2158 = vmatpush1.msra.mxu0 0.0
        %2159 = vmatprep.subr.mxu0 0.0
        %2160 = vmatpush1.msra.mxu0 0.0
        %2161 = vmatprep.subr.mxu0 0.0
        %2162 = vmatpush1.msra.mxu0 0.0
        %2163 = vmatprep.subr.mxu0 0.0
        %2164 = vmatpush1.msra.mxu0 0.0
        %2165 = vmatprep.subr.mxu0 0.0
        %2166 = vmatpush1.msra.mxu0 0.0
        %2167 = vmatprep.subr.mxu0 0.0
        %2168 = vmatpush1.msra.mxu0 0.0
        %2169 = vmatprep.subr.mxu0 0.0
        %2170 = vmatpush1.msra.mxu0 0.0
        %2171 = vmatprep.subr.mxu0 0.0
        %2172 = vmatpush1.msra.mxu0 0.0
        %2173 = vmatprep.subr.mxu0 0.0
        %2174 = vmatpush1.msra.mxu0 0.0
        %2175 = vmatprep.mubr.f32.mxu0 0.0
        %2176 = vmatmul.mubr.f32.gmra.mrb[0].mxu0 %v2106
        %v2177 = vpop.f32.mrb[0].mxu0
        %v2178 = vadd.f32 %v2103, %v2177
        %v2179 = vpop.f32.mrb[0].mxu0
        %2180 = vmatprep.mubr.f32.mxu0 0.0
        %2181 = vmatmul.mubr.f32.gmra.mrb[0].mxu0 %v2109
        %v2182 = vpop.f32.mrb[0].mxu0
        %v2183 = vadd.f32 %v2103, %v2182
        %v2184 = vpop.f32.mrb[0].mxu0
        %2185 = vdwg.mxu0
        %v2186 = vadd.f32 %v648, %v2178
        %v2187 = vadd.f32 %v649, %v2183
        %v2188 = vld [vmem:[%s612] sm:$0x1]
        %v2189 = vld [vmem:[%s615] sm:$0x1]
        %v2190 = vsel %vm661, %v2186, 0.0
        %2191 = vadd.xlane.f32.xlu0 %v2190
        %v2192 = vpop.xlane.xlu0 %2191
        %v2193 = vsel %vm661, %v2187, 0.0
        %2194 = vadd.xlane.f32.xlu0 %v2193
        %v2195 = vpop.xlane.xlu0 %2194
        %v2196 = vrcp.pop 32.0
        %v2197 = vmul.f32 %v2192, %v2196
        %v2198 = vmul.f32 %v2195, %v2196
        %v2199 = vsub.f32 %v2186, %v2197
        %v2200 = vsub.f32 %v2187, %v2198
        %v2201 = vmul.f32 %v2199, %v2199
        %v2202 = vmul.f32 %v2200, %v2200
        %v2203 = vsel %vm661, %v2201, 0.0
        %2204 = vadd.xlane.f32.xlu0 %v2203
        %v2205 = vpop.xlane.xlu0 %2204
        %v2206 = vsel %vm661, %v2202, 0.0
        %2207 = vadd.xlane.f32.xlu0 %v2206
        %v2208 = vpop.xlane.xlu0 %2207
        %v2209 = vmul.f32 %v2205, %v2196
        %v2210 = vmul.f32 %v2208, %v2196
        %v2211 = vadd.f32 %v2209, 1e-05
        %v2212 = vadd.f32 %v2210, 1e-05
        %v2213 = vrsqrt.pop %v2211
        %v2214 = vrsqrt.pop %v2212
        %v2215 = vmul.f32 %v2199, %v2213
        %v2216 = vmul.f32 %v2200, %v2214
        %v2218 = vlaneseq
        %v2219 = vshrl.u32 %v2218, 7
        %v2220 = vsub.s32 0, %v2219
        %v2221 = vrot.slane %v2188, %v2220
        %v2223 = vmul.f32 %v2215, %v2221
        %v2224 = vmul.f32 %v2216, %v2221
        %v2226 = vlaneseq
        %v2227 = vshrl.u32 %v2226, 7
        %v2228 = vsub.s32 0, %v2227
        %v2229 = vrot.slane %v2189, %v2228
        %v2231 = vadd.f32 %v2223, %v2229
        %v2232 = vadd.f32 %v2224, %v2229
        %v2233 = vld [vmem:[%s620] sm:$0xff]
        %v2234 = vld [vmem:[%s620 + $0x8] sm:$0xff]
        %v2235 = vld [vmem:[%s620 + $0x10] sm:$0xff]
        %v2236 = vld [vmem:[%s620 + $0x18] sm:$0xff]
        %v2237 = vld [vmem:[%s623] sm:$0x1]
        %v2239 = vlaneseq
        %v2240 = vshrl.u32 %v2239, 7
        %v2241 = vsub.s32 0, %v2240
        %v2242 = vrot.slane %v2237, %v2241
        %v2245 = vsel %vm661, %v2231, 0
        %v2248 = vsel %vm661, %v2232, 0
        %2250 = vmatprep.subr.mxu0 0.0
        %2251 = vmatpush1.msra.mxu0 %v2233
        %2252 = vmatprep.subr.mxu0 0.0
        %2253 = vmatpush1.msra.mxu0 %v2234
        %2254 = vmatprep.subr.mxu0 0.0
        %2255 = vmatpush1.msra.mxu0 %v2235
        %2256 = vmatprep.subr.mxu0 0.0
        %2257 = vmatpush1.msra.mxu0 %v2236
        %2258 = vmatprep.subr.mxu0 0.0
        %2259 = vmatpush1.msra.mxu0 0.0
        %2260 = vmatprep.subr.mxu0 0.0
        %2261 = vmatpush1.msra.mxu0 0.0
        %2262 = vmatprep.subr.mxu0 0.0
        %2263 = vmatpush1.msra.mxu0 0.0
        %2264 = vmatprep.subr.mxu0 0.0
        %2265 = vmatpush1.msra.mxu0 0.0
        %2266 = vmatprep.subr.mxu0 0.0
        %2267 = vmatpush1.msra.mxu0 0.0
        %2268 = vmatprep.subr.mxu0 0.0
        %2269 = vmatpush1.msra.mxu0 0.0
        %2270 = vmatprep.subr.mxu0 0.0
        %2271 = vmatpush1.msra.mxu0 0.0
        %2272 = vmatprep.subr.mxu0 0.0
        %2273 = vmatpush1.msra.mxu0 0.0
        %2274 = vmatprep.subr.mxu0 0.0
        %2275 = vmatpush1.msra.mxu0 0.0
        %2276 = vmatprep.subr.mxu0 0.0
        %2277 = vmatpush1.msra.mxu0 0.0
        %2278 = vmatprep.subr.mxu0 0.0
        %2279 = vmatpush1.msra.mxu0 0.0
        %2280 = vmatprep.subr.mxu0 0.0
        %2281 = vmatpush1.msra.mxu0 0.0
        %2282 = vmatprep.subr.mxu0 0.0
        %2283 = vmatpush1.msra.mxu0 0.0
        %2284 = vmatprep.subr.mxu0 0.0
        %2285 = vmatpush1.msra.mxu0 0.0
        %2286 = vmatprep.subr.mxu0 0.0
        %2287 = vmatpush1.msra.mxu0 0.0
        %2288 = vmatprep.subr.mxu0 0.0
        %2289 = vmatpush1.msra.mxu0 0.0
        %2290 = vmatprep.subr.mxu0 0.0
        %2291 = vmatpush1.msra.mxu0 0.0
        %2292 = vmatprep.subr.mxu0 0.0
        %2293 = vmatpush1.msra.mxu0 0.0
        %2294 = vmatprep.subr.mxu0 0.0
        %2295 = vmatpush1.msra.mxu0 0.0
        %2296 = vmatprep.subr.mxu0 0.0
        %2297 = vmatpush1.msra.mxu0 0.0
        %2298 = vmatprep.subr.mxu0 0.0
        %2299 = vmatpush1.msra.mxu0 0.0
        %2300 = vmatprep.subr.mxu0 0.0
        %2301 = vmatpush1.msra.mxu0 0.0
        %2302 = vmatprep.subr.mxu0 0.0
        %2303 = vmatpush1.msra.mxu0 0.0
        %2304 = vmatprep.subr.mxu0 0.0
        %2305 = vmatpush1.msra.mxu0 0.0
        %2306 = vmatprep.subr.mxu0 0.0
        %2307 = vmatpush1.msra.mxu0 0.0
        %2308 = vmatprep.subr.mxu0 0.0
        %2309 = vmatpush1.msra.mxu0 0.0
        %2310 = vmatprep.subr.mxu0 0.0
        %2311 = vmatpush1.msra.mxu0 0.0
        %2312 = vmatprep.subr.mxu0 0.0
        %2313 = vmatpush1.msra.mxu0 0.0
        %2314 = vmatprep.mubr.f32.mxu0 0.0
        %2315 = vmatmul.mubr.f32.gmra.mrb[0].mxu0 %v2245
        %v2316 = vpop.f32.mrb[0].mxu0
        %v2317 = vadd.f32 %v2242, %v2316
        %v2318 = vpop.f32.mrb[0].mxu0
        %2319 = vmatprep.mubr.f32.mxu0 0.0
        %2320 = vmatmul.mubr.f32.gmra.mrb[0].mxu0 %v2248
        %v2321 = vpop.f32.mrb[0].mxu0
        %v2322 = vadd.f32 %v2242, %v2321
        %v2323 = vpop.f32.mrb[0].mxu0
        %2324 = vdwg.mxu0
        %v2325 = vmax.f32 %v2317, 0.0
        %v2326 = vmax.f32 %v2322, 0.0
        %v2327 = vld [vmem:[%s628] sm:$0xff]
        %v2328 = vld [vmem:[%s628 + $0x8] sm:$0xff]
        %v2329 = vld [vmem:[%s628 + $0x10] sm:$0xff]
        %v2330 = vld [vmem:[%s628 + $0x18] sm:$0xff]
        %v2331 = vld [vmem:[%s628 + $0x20] sm:$0xff]
        %v2332 = vld [vmem:[%s628 + $0x28] sm:$0xff]
        %v2333 = vld [vmem:[%s628 + $0x30] sm:$0xff]
        %v2334 = vld [vmem:[%s628 + $0x38] sm:$0xff]
        %v2335 = vld [vmem:[%s631] sm:$0x1]
        %v2337 = vlaneseq
        %v2338 = vshrl.u32 %v2337, 7
        %v2339 = vsub.s32 0, %v2338
        %v2340 = vrot.slane %v2335, %v2339
        %vm2342 = vcmask 523264
        %v2344 = vsel %vm2342, %v2325, 0
        %v2347 = vsel %vm2342, %v2326, 0
        %2349 = vmatprep.subr.mxu0 0.0
        %2350 = vmatpush1.msra.mxu0 %v2327
        %2351 = vmatprep.subr.mxu0 0.0
        %2352 = vmatpush1.msra.mxu0 %v2328
        %2353 = vmatprep.subr.mxu0 0.0
        %2354 = vmatpush1.msra.mxu0 %v2329
        %2355 = vmatprep.subr.mxu0 0.0
        %2356 = vmatpush1.msra.mxu0 %v2330
        %2357 = vmatprep.subr.mxu0 0.0
        %2358 = vmatpush1.msra.mxu0 %v2331
        %2359 = vmatprep.subr.mxu0 0.0
        %2360 = vmatpush1.msra.mxu0 %v2332
        %2361 = vmatprep.subr.mxu0 0.0
        %2362 = vmatpush1.msra.mxu0 %v2333
        %2363 = vmatprep.subr.mxu0 0.0
        %2364 = vmatpush1.msra.mxu0 %v2334
        %2365 = vmatprep.subr.mxu0 0.0
        %2366 = vmatpush1.msra.mxu0 0.0
        %2367 = vmatprep.subr.mxu0 0.0
        %2368 = vmatpush1.msra.mxu0 0.0
        %2369 = vmatprep.subr.mxu0 0.0
        %2370 = vmatpush1.msra.mxu0 0.0
        %2371 = vmatprep.subr.mxu0 0.0
        %2372 = vmatpush1.msra.mxu0 0.0
        %2373 = vmatprep.subr.mxu0 0.0
        %2374 = vmatpush1.msra.mxu0 0.0
        %2375 = vmatprep.subr.mxu0 0.0
        %2376 = vmatpush1.msra.mxu0 0.0
        %2377 = vmatprep.subr.mxu0 0.0
        %2378 = vmatpush1.msra.mxu0 0.0
        %2379 = vmatprep.subr.mxu0 0.0
        %2380 = vmatpush1.msra.mxu0 0.0
        %2381 = vmatprep.subr.mxu0 0.0
        %2382 = vmatpush1.msra.mxu0 0.0
        %2383 = vmatprep.subr.mxu0 0.0
        %2384 = vmatpush1.msra.mxu0 0.0
        %2385 = vmatprep.subr.mxu0 0.0
        %2386 = vmatpush1.msra.mxu0 0.0
        %2387 = vmatprep.subr.mxu0 0.0
        %2388 = vmatpush1.msra.mxu0 0.0
        %2389 = vmatprep.subr.mxu0 0.0
        %2390 = vmatpush1.msra.mxu0 0.0
        %2391 = vmatprep.subr.mxu0 0.0
        %2392 = vmatpush1.msra.mxu0 0.0
        %2393 = vmatprep.subr.mxu0 0.0
        %2394 = vmatpush1.msra.mxu0 0.0
        %2395 = vmatprep.subr.mxu0 0.0
        %2396 = vmatpush1.msra.mxu0 0.0
        %2397 = vmatprep.subr.mxu0 0.0
        %2398 = vmatpush1.msra.mxu0 0.0
        %2399 = vmatprep.subr.mxu0 0.0
        %2400 = vmatpush1.msra.mxu0 0.0
        %2401 = vmatprep.subr.mxu0 0.0
        %2402 = vmatpush1.msra.mxu0 0.0
        %2403 = vmatprep.subr.mxu0 0.0
        %2404 = vmatpush1.msra.mxu0 0.0
        %2405 = vmatprep.subr.mxu0 0.0
        %2406 = vmatpush1.msra.mxu0 0.0
        %2407 = vmatprep.subr.mxu0 0.0
        %2408 = vmatpush1.msra.mxu0 0.0
        %2409 = vmatprep.subr.mxu0 0.0
        %2410 = vmatpush1.msra.mxu0 0.0
        %2411 = vmatprep.subr.mxu0 0.0
        %2412 = vmatpush1.msra.mxu0 0.0
        %2413 = vmatprep.mubr.f32.mxu0 0.0
        %2414 = vmatmul.mubr.f32.gmra.mrb[0].mxu0 %v2344
        %v2415 = vpop.f32.mrb[0].mxu0
        %v2416 = vadd.f32 %v2340, %v2415
        %v2417 = vpop.f32.mrb[0].mxu0
        %2418 = vmatprep.mubr.f32.mxu0 0.0
        %2419 = vmatmul.mubr.f32.gmra.mrb[0].mxu0 %v2347
        %v2420 = vpop.f32.mrb[0].mxu0
        %v2421 = vadd.f32 %v2340, %v2420
        %v2422 = vpop.f32.mrb[0].mxu0
        %2423 = vdwg.mxu0
        %v2424 = vadd.f32 %v2231, %v2416
        %v2425 = vadd.f32 %v2232, %v2421
        %v2426 = vld [vmem:[%s634] sm:$0x1]
        %v2427 = vld [vmem:[%s637] sm:$0x1]
        %v2428 = vsel %vm661, %v2424, 0.0
        %2429 = vadd.xlane.f32.xlu0 %v2428
        %v2430 = vpop.xlane.xlu0 %2429
        %v2431 = vsel %vm661, %v2425, 0.0
        %2432 = vadd.xlane.f32.xlu0 %v2431
        %v2433 = vpop.xlane.xlu0 %2432
        %v2434 = vmul.f32 %v2430, %v2196
        %v2435 = vmul.f32 %v2433, %v2196
        %v2436 = vsub.f32 %v2424, %v2434
        %v2437 = vsub.f32 %v2425, %v2435
        %v2438 = vmul.f32 %v2436, %v2436
        %v2439 = vmul.f32 %v2437, %v2437
        %v2440 = vsel %vm661, %v2438, 0.0
        %2441 = vadd.xlane.f32.xlu0 %v2440
        %v2442 = vpop.xlane.xlu0 %2441
        %v2443 = vsel %vm661, %v2439, 0.0
        %2444 = vadd.xlane.f32.xlu0 %v2443
        %v2445 = vpop.xlane.xlu0 %2444
        %v2446 = vmul.f32 %v2442, %v2196
        %v2447 = vmul.f32 %v2445, %v2196
        %v2448 = vadd.f32 %v2446, 1e-05
        %v2449 = vadd.f32 %v2447, 1e-05
        %v2450 = vrsqrt.pop %v2448
        %v2451 = vrsqrt.pop %v2449
        %v2452 = vmul.f32 %v2436, %v2450
        %v2453 = vmul.f32 %v2437, %v2451
        %v2455 = vlaneseq
        %v2456 = vshrl.u32 %v2455, 7
        %v2457 = vsub.s32 0, %v2456
        %v2458 = vrot.slane %v2426, %v2457
        %v2460 = vmul.f32 %v2452, %v2458
        %v2461 = vmul.f32 %v2453, %v2458
        %v2463 = vlaneseq
        %v2464 = vshrl.u32 %v2463, 7
        %v2465 = vsub.s32 0, %v2464
        %v2466 = vrot.slane %v2427, %v2465
        %v2468 = vadd.f32 %v2460, %v2466
        %v2469 = vadd.f32 %v2461, %v2466
        %2470 = vst.msk [vmem:[#allocation2] sm:$0xff] %vm661, %v2468
        %2471 = vst.msk [vmem:[#allocation2 + $0x8] sm:$0xff] %vm661, %v2469
        %p2472 = scmp.eq.s32.totalorder %s30, 1
        // Predicated region
        $region77: #{transformer_with_maxpool.1} parent=71 // pred_check
          %p2473 = pneg %p2472
        $region78: #{transformer_with_maxpool.1} parent=71 // pred_check_branch
          %2475 = sbr.rel (%p2473) target = $region80
        $region79: #{transformer_with_maxpool.1} parent=71 // pred_region
          %v2476 = vsel %vm661, %v2468, -inf
          %v2477 = vrot.slane %v2476, 4
          %v2478 = vmax.f32 %v2476, %v2477
          %v2479 = vrot.slane %v2478, 2
          %v2480 = vmax.f32 %v2478, %v2479
          %v2481 = vrot.slane %v2480, 1
          %v2482 = vmax.f32 %v2480, %v2481
          %v2483 = vsel %vm661, %v2469, -inf
          %v2484 = vrot.slane %v2483, 4
          %v2485 = vmax.f32 %v2483, %v2484
          %v2486 = vrot.slane %v2485, 2
          %v2487 = vmax.f32 %v2485, %v2486
          %v2488 = vrot.slane %v2487, 1
          %v2489 = vmax.f32 %v2487, %v2488
          %vm2490 = vcmask 253952
          %2491 = vst.msk [vmem:[#allocation3] sm:$0x1] %vm2490, %v2482
          %2492 = vst.msk [vmem:[#allocation3 + $0x1] sm:$0x1] %vm2490, %v2489
        $region80: #{transformer_with_maxpool.1} parent=71 // pred_fallthru
          _
        // Predicated region
        $region81: #{transformer_with_maxpool.1} parent=71 // pred_check
          %p2493 = pneg %p393
        $region82: #{transformer_with_maxpool.1} parent=71 // pred_check_branch
          %2495 = sbr.rel (%p2493) target = $region84
        $region83: #{transformer_with_maxpool.1} parent=71 // pred_region
          %s2496 = smul.u32 2, %s29
          %s2498 = ssub.s32 32, 32
          %2499 = vsyncadd [#allocation4], %s2498
          %s2500 = smul.addr %s2496, 16
          %s2501 = scalar_lea.hbm %s13, %s2500
          %s2502 = sshll.u32 [#allocation3], 4
          %s2503 = int_to_ptr.vmem [resolvable:$true] %s2502
          %2508 = dma.vmem_to_hbm [thread:$0]  %s2503, 32, %s2501, [#allocation4], 16, 16, 1
        $region84: #{transformer_with_maxpool.1} parent=71 // pred_fallthru
          _
        // Predicated region
        $region85: #{transformer_with_maxpool.1} parent=71 // pred_check
          %p2509 = pneg %p393
        $region86: #{transformer_with_maxpool.1} parent=71 // pred_check_branch
          %2511 = sbr.rel (%p2509) target = $region88
        $region87: #{transformer_with_maxpool.1} parent=71 // pred_region
          %2512 = dma.done [#allocation4], 32
        $region88: #{transformer_with_maxpool.1} parent=71 // pred_fallthru
          _
      $region72: #{transformer_with_maxpool.1} parent=5 // pred_fallthru
        _
      %p2513 = scmp.le.s32.totalorder 2, %s20
      // Predicated region
      $region89: #{transformer_with_maxpool.1} parent=5 // pred_check
        %p2514 = pneg %p2513
      $region90: #{transformer_with_maxpool.1} parent=5 // pred_check_branch
        %2516 = sbr.rel (%p2514) target = $region92
      $region91: #{transformer_with_maxpool.1} parent=5 // pred_region
        %s2517 = ssub.s32 %s20, 2
      $region92: #{transformer_with_maxpool.1} parent=5 // pred_fallthru
        _
    $region6: #{transformer_with_maxpool.1} parent=1 // loop_footer
      %s24 = sadd.s32 1, %s20
    $region7: #{transformer_with_maxpool.1} parent=1 // loop_footer_branch
      %19 = sbr.rel target = $region3
    $region8: #{transformer_with_maxpool.1} parent=1 // loop_exit
      _
    %2518 = vsyncpa [#allocation4], 1
    %s2519 = scalar_lea.sflag [#allocation4], 1
    %2520 = vsyncpa %s2519, 1

</llo_original>
